<compile_context>
chip_gen: v5e
topology: v5e:2x2
jax: 0.10.0
libtpu: 0.0.40
codegen_flags: <defaults>
</compile_context>

<pallas_src>
import functools

import jax
import jax.numpy as jnp
from jax import lax
from jax.experimental import pallas as pl
from jax.experimental.pallas import tpu as pltpu

# Contract last dim of x (M,K) with last dim of w (N,K): x @ w.T with no transpose.
DN = (((1,), (1,)), ((), ()))

_VMEM_LIMIT = 48 * 1024 * 1024  # safe on v5e/v6e (128 MiB) and v7x (64 MiB)


def _tile(dim, desired):
    """Use `desired` if it divides `dim`, else fall back to the full dim."""
    return desired if dim % desired == 0 else dim


# ---------------------------------------------------------------------------
# Kernel: fused LayerNorm + (QKV) matmul + bias
# ---------------------------------------------------------------------------

def _ln_matmul_bias_kernel(x_ref, g_ref, b_ref, w_ref, bias_ref, o_ref):
    x = x_ref[...]                                        # (tm, E) f32
    mean = jnp.mean(x, axis=-1, keepdims=True)
    var = jnp.mean(jnp.square(x - mean), axis=-1, keepdims=True)
    h = ((x - mean) * lax.rsqrt(var + 1e-5) * g_ref[...] + b_ref[...]
         ).astype(jnp.bfloat16)
    acc = lax.dot_general(h, w_ref[...], DN, preferred_element_type=jnp.float32)
    o_ref[...] = acc + bias_ref[...]


def ln_matmul_bias(x, gamma, beta, w, bias, *, tm=256, tn=256):
    M, E = x.shape
    N = w.shape[0]
    tm, tn = _tile(M, tm), _tile(N, tn)
    return pl.pallas_call(
        _ln_matmul_bias_kernel,
        out_shape=jax.ShapeDtypeStruct((M, N), jnp.float32),
        grid=(M // tm, N // tn),
        in_specs=[
            pl.BlockSpec((tm, E), lambda i, j: (i, 0)),
            pl.BlockSpec((1, E), lambda i, j: (0, 0)),
            pl.BlockSpec((1, E), lambda i, j: (0, 0)),
            pl.BlockSpec((tn, E), lambda i, j: (j, 0)),
            pl.BlockSpec((1, tn), lambda i, j: (0, j)),
        ],
        out_specs=pl.BlockSpec((tm, tn), lambda i, j: (i, j)),
        compiler_params=pltpu.CompilerParams(
            dimension_semantics=("parallel", "parallel"),
            vmem_limit_bytes=_VMEM_LIMIT),
    )(x, gamma.reshape(1, E), beta.reshape(1, E), w,
      bias.reshape(1, N).astype(jnp.float32))


# ---------------------------------------------------------------------------
# Kernel: K-tiled matmul (+ bias + residual variant)
# ---------------------------------------------------------------------------

def _matmul_bias_res_kernel(x_ref, w_ref, b_ref, r_ref, o_ref, acc_ref):
    k = pl.program_id(2)

    @pl.when(k == 0)
    def _():
        acc_ref[...] = jnp.zeros_like(acc_ref)

    acc_ref[...] += lax.dot_general(x_ref[...], w_ref[...], DN,
                                    preferred_element_type=jnp.float32)

    @pl.when(k == pl.num_programs(2) - 1)
    def _():
        o_ref[...] = acc_ref[...] + b_ref[...] + r_ref[...]


def matmul_bias_residual(x, w, bias, residual, *, tm=256, tn=256, tk=512):
    M, K = x.shape
    N = w.shape[0]
    tm, tn, tk = _tile(M, tm), _tile(N, tn), _tile(K, tk)
    return pl.pallas_call(
        _matmul_bias_res_kernel,
        out_shape=jax.ShapeDtypeStruct((M, N), jnp.float32),
        grid=(M // tm, N // tn, K // tk),
        in_specs=[
            pl.BlockSpec((tm, tk), lambda i, j, k: (i, k)),
            pl.BlockSpec((tn, tk), lambda i, j, k: (j, k)),
            pl.BlockSpec((1, tn), lambda i, j, k: (0, j)),
            pl.BlockSpec((tm, tn), lambda i, j, k: (i, j)),
        ],
        out_specs=pl.BlockSpec((tm, tn), lambda i, j, k: (i, j)),
        scratch_shapes=[pltpu.VMEM((tm, tn), jnp.float32)],
        compiler_params=pltpu.CompilerParams(
            dimension_semantics=("parallel", "parallel", "arbitrary"),
            vmem_limit_bytes=_VMEM_LIMIT),
    )(x, w, bias.reshape(1, N).astype(jnp.float32), residual)


def _matmul_kernel(x_ref, w_ref, o_ref, acc_ref):
    k = pl.program_id(2)

    @pl.when(k == 0)
    def _():
        acc_ref[...] = jnp.zeros_like(acc_ref)

    acc_ref[...] += lax.dot_general(x_ref[...], w_ref[...], DN,
                                    preferred_element_type=jnp.float32)

    @pl.when(k == pl.num_programs(2) - 1)
    def _():
        o_ref[...] = acc_ref[...]


def matmul(x, w, *, tm=256, tn=512, tk=512):
    M, K = x.shape
    N = w.shape[0]
    tm, tn, tk = _tile(M, tm), _tile(N, tn), _tile(K, tk)
    return pl.pallas_call(
        _matmul_kernel,
        out_shape=jax.ShapeDtypeStruct((M, N), jnp.float32),
        grid=(M // tm, N // tn, K // tk),
        in_specs=[
            pl.BlockSpec((tm, tk), lambda i, j, k: (i, k)),
            pl.BlockSpec((tn, tk), lambda i, j, k: (j, k)),
        ],
        out_specs=pl.BlockSpec((tm, tn), lambda i, j, k: (i, j)),
        scratch_shapes=[pltpu.VMEM((tm, tn), jnp.float32)],
        compiler_params=pltpu.CompilerParams(
            dimension_semantics=("parallel", "parallel", "arbitrary"),
            vmem_limit_bytes=_VMEM_LIMIT),
    )(x, w)


# ---------------------------------------------------------------------------
# Kernel: fused LayerNorm + SwiGLU + residual (hidden dim is the contraction)
# ---------------------------------------------------------------------------

def _ln_swiglu_res_kernel(x_ref, g_ref, b_ref, w1_ref, w3_ref, w2_ref, o_ref,
                          acc_ref):
    j = pl.program_id(1)
    x = x_ref[...]                                        # (tm, E) f32
    mean = jnp.mean(x, axis=-1, keepdims=True)
    var = jnp.mean(jnp.square(x - mean), axis=-1, keepdims=True)
    h = ((x - mean) * lax.rsqrt(var + 1e-5) * g_ref[...] + b_ref[...]
         ).astype(jnp.bfloat16)
    h1 = lax.dot_general(h, w1_ref[...], DN, preferred_element_type=jnp.float32)
    h3 = lax.dot_general(h, w3_ref[...], DN, preferred_element_type=jnp.float32)
    gated = (h1 * jax.nn.sigmoid(h1) * h3).astype(jnp.bfloat16)   # (tm, th)

    @pl.when(j == 0)
    def _():
        acc_ref[...] = x          # residual initialises the accumulator

    # w2 block is (E, th): contract the hidden tile -> partial (tm, E)
    acc_ref[...] += lax.dot_general(gated, w2_ref[...], DN,
                                    preferred_element_type=jnp.float32)

    @pl.when(j == pl.num_programs(1) - 1)
    def _():
        o_ref[...] = acc_ref[...]


def ln_swiglu_residual(x, gamma, beta, w1, w3, w2, *, tm=256, th=256):
    M, E = x.shape
    Hd = w1.shape[0]
    tm, th = _tile(M, tm), _tile(Hd, th)
    return pl.pallas_call(
        _ln_swiglu_res_kernel,
        out_shape=jax.ShapeDtypeStruct((M, E), jnp.float32),
        grid=(M // tm, Hd // th),
        in_specs=[
            pl.BlockSpec((tm, E), lambda i, j: (i, 0)),
            pl.BlockSpec((1, E), lambda i, j: (0, 0)),
            pl.BlockSpec((1, E), lambda i, j: (0, 0)),
            pl.BlockSpec((th, E), lambda i, j: (j, 0)),
            pl.BlockSpec((th, E), lambda i, j: (j, 0)),
            pl.BlockSpec((E, th), lambda i, j: (0, j)),
        ],
        out_specs=pl.BlockSpec((tm, E), lambda i, j: (i, 0)),
        scratch_shapes=[pltpu.VMEM((tm, E), jnp.float32)],
        compiler_params=pltpu.CompilerParams(
            dimension_semantics=("parallel", "arbitrary"),
            vmem_limit_bytes=_VMEM_LIMIT),
    )(x, gamma.reshape(1, E), beta.reshape(1, E), w1, w3, w2)


# ---------------------------------------------------------------------------
# Kernel: flash-style MQA attention (online softmax, in-kernel iota mask,
#         r query heads share each KV head's DMA'd K/V tile)
# ---------------------------------------------------------------------------

def _flash_mqa_kernel(q_ref, k_ref, v_ref, o_ref, m_ref, l_ref, acc_ref, *,
                      scale):
    qi = pl.program_id(2)
    ki = pl.program_id(3)
    r, tq = q_ref.shape[2], q_ref.shape[3]
    tk = k_ref.shape[2]

    @pl.when(ki == 0)
    def _():
        m_ref[...] = jnp.full(m_ref.shape, -jnp.inf, jnp.float32)
        l_ref[...] = jnp.zeros(l_ref.shape, jnp.float32)
        acc_ref[...] = jnp.zeros(acc_ref.shape, jnp.float32)

    k = k_ref[0, 0].astype(jnp.bfloat16)                  # (tk, D)
    v = v_ref[0, 0].astype(jnp.bfloat16)                  # (tk, D)

    # Reference: masked_fill(-1e9) where triu(ones, diagonal=1) == 0,
    # i.e. where q_pos >= k_pos.
    q_pos = qi * tq + lax.broadcasted_iota(jnp.int32, (tq, tk), 0)
    k_pos = ki * tk + lax.broadcasted_iota(jnp.int32, (tq, tk), 1)
    masked = q_pos >= k_pos

    for h in range(r):                                    # static unroll over shared heads
        q = (q_ref[0, 0, h] * scale).astype(jnp.bfloat16)           # (tq, D)
        s = lax.dot_general(q, k, DN, preferred_element_type=jnp.float32)
        s = jnp.where(masked, -1e9, s)                              # (tq, tk)
        m_prev = m_ref[h]                                           # (tq, 1)
        m_new = jnp.maximum(m_prev, jnp.max(s, axis=-1, keepdims=True))
        alpha = jnp.exp(m_prev - m_new)
        p = jnp.exp(s - m_new)
        l_ref[h] = alpha * l_ref[h] + jnp.sum(p, axis=-1, keepdims=True)
        acc_ref[h] = alpha * acc_ref[h] + lax.dot_general(
            p.astype(jnp.bfloat16), v, (((1,), (0,)), ((), ())),
            preferred_element_type=jnp.float32)
        m_ref[h] = m_new

    @pl.when(ki == pl.num_programs(3) - 1)
    def _():
        inv_l = pl.reciprocal(l_ref[...], approx=True)
        o_ref[0, 0] = (acc_ref[...] * inv_l).astype(o_ref.dtype)


def flash_mqa_attention(q, k, v, *, scale, tq=256, tkv=256):
    # q: (B, Hkv, r, S, D)  k, v: (B, Hkv, S, D)
    B, Hkv, r, S, D = q.shape
    tq, tkv = _tile(S, tq), _tile(S, tkv)
    kernel = functools.partial(_flash_mqa_kernel, scale=scale)
    return pl.pallas_call(
        kernel,
        out_shape=jax.ShapeDtypeStruct((B, Hkv, r, S, D), jnp.float32),
        grid=(B, Hkv, S // tq, S // tkv),
        in_specs=[
            pl.BlockSpec((1, 1, r, tq, D), lambda b, g, i, j: (b, g, 0, i, 0)),
            pl.BlockSpec((1, 1, tkv, D), lambda b, g, i, j: (b, g, j, 0)),
            pl.BlockSpec((1, 1, tkv, D), lambda b, g, i, j: (b, g, j, 0)),
        ],
        out_specs=pl.BlockSpec((1, 1, r, tq, D),
                               lambda b, g, i, j: (b, g, 0, i, 0)),
        scratch_shapes=[
            pltpu.VMEM((r, tq, 1), jnp.float32),   # running max
            pltpu.VMEM((r, tq, 1), jnp.float32),   # running denom
            pltpu.VMEM((r, tq, D), jnp.float32),   # running numerator
        ],
        compiler_params=pltpu.CompilerParams(
            dimension_semantics=("parallel", "parallel", "parallel",
                                 "arbitrary")),
    )(q, k, v)


# ---------------------------------------------------------------------------
# Kernel: standalone LayerNorm (final norm; its output is also returned)
# ---------------------------------------------------------------------------

def _layernorm_kernel(x_ref, g_ref, b_ref, o_ref):
    x = x_ref[...]
    mean = jnp.mean(x, axis=-1, keepdims=True)
    var = jnp.mean(jnp.square(x - mean), axis=-1, keepdims=True)
    o_ref[...] = (x - mean) * lax.rsqrt(var + 1e-5) * g_ref[...] + b_ref[...]


def layernorm(x, gamma, beta, *, tm=256):
    M, E = x.shape
    tm = _tile(M, tm)
    return pl.pallas_call(
        _layernorm_kernel,
        out_shape=jax.ShapeDtypeStruct((M, E), jnp.float32),
        grid=(M // tm,),
        in_specs=[
            pl.BlockSpec((tm, E), lambda i: (i, 0)),
            pl.BlockSpec((1, E), lambda i: (0, 0)),
            pl.BlockSpec((1, E), lambda i: (0, 0)),
        ],
        out_specs=pl.BlockSpec((tm, E), lambda i: (i, 0)),
        compiler_params=pltpu.CompilerParams(dimension_semantics=("parallel",)),
    )(x, gamma.reshape(1, E), beta.reshape(1, E))


# ---------------------------------------------------------------------------
# Parameter init (deterministic; matmul weights stored in bf16, QKV pre-fused)
# ---------------------------------------------------------------------------

def init_params(key, vocab_size, embed_dim, num_layers, num_heads,
                num_kv_heads, mlp_ratio):
    head_dim = embed_dim // num_heads
    kv_dim = num_kv_heads * head_dim
    hidden = int(embed_dim * mlp_ratio)

    def nrm(k, shape):
        return 0.02 * jax.random.normal(k, shape, dtype=jnp.float32)

    keys = jax.random.split(key, num_layers + 1)
    emb = nrm(keys[0], (vocab_size, embed_dim)).astype(jnp.bfloat16)  # tied
    blocks = []
    for l in range(num_layers):
        ks = jax.random.split(keys[l + 1], 7)
        wq = nrm(ks[0], (embed_dim, embed_dim))
        wk = nrm(ks[1], (kv_dim, embed_dim))
        wv = nrm(ks[2], (kv_dim, embed_dim))
        blocks.append(dict(
            ln1_g=jnp.ones((embed_dim,), jnp.float32),
            ln1_b=jnp.zeros((embed_dim,), jnp.float32),
            # Q/K/V fused into one (E + 2*kv_dim, E) weight (PyTorch out,in layout).
            wqkv=jnp.concatenate([wq, wk, wv], axis=0).astype(jnp.bfloat16),
            bqkv=jnp.zeros((embed_dim + 2 * kv_dim,), jnp.float32),
            wo=nrm(ks[3], (embed_dim, embed_dim)).astype(jnp.bfloat16),
            bo=jnp.zeros((embed_dim,), jnp.float32),
            ln2_g=jnp.ones((embed_dim,), jnp.float32),
            ln2_b=jnp.zeros((embed_dim,), jnp.float32),
            w1=nrm(ks[4], (hidden, embed_dim)).astype(jnp.bfloat16),
            w3=nrm(ks[5], (hidden, embed_dim)).astype(jnp.bfloat16),
            w2=nrm(ks[6], (embed_dim, hidden)).astype(jnp.bfloat16),
        ))
    return dict(emb=emb, blocks=blocks,
                lnf_g=jnp.ones((embed_dim,), jnp.float32),
                lnf_b=jnp.zeros((embed_dim,), jnp.float32))


# ---------------------------------------------------------------------------
# Model forward (glue in JAX, hot paths in Pallas kernels)
# ---------------------------------------------------------------------------

def jarvis_forward(params, input_ids, *, num_heads, num_kv_heads):
    B, S = input_ids.shape
    emb = params["emb"]
    vocab, E = emb.shape
    D = E // num_heads
    kv_dim = num_kv_heads * D
    r = num_heads // num_kv_heads
    M = B * S
    scale = float(D) ** -0.5

    # Residual stream kept in f32.
    x = emb[input_ids].astype(jnp.float32).reshape(M, E)

    for blk in params["blocks"]:
        # --- attention sub-block: fused LN + QKV projection ---
        qkv = ln_matmul_bias(x, blk["ln1_g"], blk["ln1_b"],
                             blk["wqkv"], blk["bqkv"])          # (M, E+2*kv_dim)
        q = qkv[:, :E].reshape(B, S, num_heads, D).transpose(0, 2, 1, 3)
        q = q.reshape(B, num_kv_heads, r, S, D)                 # group shared heads
        k = qkv[:, E:E + kv_dim].reshape(B, S, num_kv_heads, D).transpose(0, 2, 1, 3)
        v = qkv[:, E + kv_dim:].reshape(B, S, num_kv_heads, D).transpose(0, 2, 1, 3)
        attn = flash_mqa_attention(q, k, v, scale=scale)        # (B, Hkv, r, S, D)
        attn = attn.transpose(0, 3, 1, 2, 4).reshape(M, E)      # back to (M, H*D)
        # out-projection + bias + residual in one K-tiled kernel
        x = matmul_bias_residual(attn.astype(jnp.bfloat16), blk["wo"],
                                 blk["bo"], x)

        # --- MLP sub-block: fused LN + SwiGLU + residual ---
        x = ln_swiglu_residual(x, blk["ln2_g"], blk["ln2_b"],
                               blk["w1"], blk["w3"], blk["w2"])

    h = layernorm(x, params["lnf_g"], params["lnf_b"])          # (M, E) f32
    # Tied output projection: vocab-tiled streamed matmul, no zero-bias DMA.
    logits = matmul(h.astype(jnp.bfloat16), emb)                # (M, vocab)

    # TODO(synk): use_cache / past_kvs path (KV-cache append) not implemented;
    # forward here corresponds to use_cache=False.
    return {"logits": logits.reshape(B, S, vocab),
            "past_kvs": None,
            "hidden_states": h.reshape(B, S, E)}


# ---------------------------------------------------------------------------

if __name__ == "__main__":
    VOCAB = 256
    EMBED_DIM = 64
    NUM_LAYERS = 2
    NUM_HEADS = 4
    NUM_KV_HEADS = 2
    SEQ = 8
    BATCH = 2

    key = jax.random.PRNGKey(0)
    pkey, dkey = jax.random.split(key)
    params = init_params(pkey, VOCAB, EMBED_DIM, NUM_LAYERS,
                         NUM_HEADS, NUM_KV_HEADS, mlp_ratio=4.0)
    input_ids = jax.random.randint(dkey, (BATCH, SEQ), 0, VOCAB, dtype=jnp.int32)

    fwd = jax.jit(functools.partial(
        jarvis_forward, num_heads=NUM_HEADS, num_kv_heads=NUM_KV_HEADS))
    out = fwd(params, input_ids)
    jax.block_until_ready(out["logits"])

    assert out["logits"].shape == (BATCH, SEQ, VOCAB)
    assert out["hidden_states"].shape == (BATCH, SEQ, EMBED_DIM)
    assert bool(jnp.all(jnp.isfinite(out["logits"])))
    print("KERNEL_OK")
</pallas_src>

<mosaic_0001>
module attributes {stable_mosaic.version = 11 : i64} {
  func.func @_flash_mqa_kernel(%arg0: i32, %arg1: i32, %arg2: i32, %arg3: i32, %arg4: memref<1x1x2x8x16xf32, #tpu.memory_space<vmem>>, %arg5: memref<1x1x8x16xf32, #tpu.memory_space<vmem>>, %arg6: memref<1x1x8x16xf32, #tpu.memory_space<vmem>>, %arg7: memref<1x1x2x8x16xf32, #tpu.memory_space<vmem>>, %arg8: memref<2x8x1xf32, #tpu.memory_space<vmem>>, %arg9: memref<2x8x1xf32, #tpu.memory_space<vmem>>, %arg10: memref<2x8x16xf32, #tpu.memory_space<vmem>>) attributes {dimension_semantics = [#tpu.dimension_semantics<parallel>, #tpu.dimension_semantics<parallel>, #tpu.dimension_semantics<parallel>, #tpu.dimension_semantics<arbitrary>], iteration_bounds = array<i64: 2, 2, 1, 1>, scalar_prefetch = 0 : i64, scratch_operands = 3 : i64, tpu.core_type = #tpu.core_type<tc>, window_params = [{transform_indices = @transform_0, window_bounds = array<i64: 1, 1, 2, 8, 16>}, {transform_indices = @transform_1, window_bounds = array<i64: 1, 1, 8, 16>}, {transform_indices = @transform_2, window_bounds = array<i64: 1, 1, 8, 16>}, {transform_indices = @transform_3, window_bounds = array<i64: 1, 1, 2, 8, 16>}]} {
    %c0_i32 = arith.constant 0 : i32
    %0 = arith.cmpi eq, %arg3, %c0_i32 : i32
    %1 = arith.extui %0 : i1 to i32
    %c0_i32_0 = arith.constant 0 : i32
    %2 = arith.cmpi ne, %1, %c0_i32_0 : i32
    scf.if %2 {
      %cst_67 = arith.constant 0xFF800000 : f32
      %101 = vector.broadcast %cst_67 : f32 to vector<2x8x1xf32>
      %c0_68 = arith.constant 0 : index
      %c0_69 = arith.constant 0 : index
      %c0_70 = arith.constant 0 : index
      %102 = vector.load %arg8[%c0_68, %c0_69, %c0_70] : memref<2x8x1xf32, #tpu.memory_space<vmem>>, vector<2x8x1xf32>
      tpu.vector_store %arg8[%c0_68, %c0_69, %c0_70], %101 {strides = array<i32>} : memref<2x8x1xf32, #tpu.memory_space<vmem>>, vector<2x8x1xf32>,
      %cst_71 = arith.constant 0.000000e+00 : f32
      %103 = vector.broadcast %cst_71 : f32 to vector<2x8x1xf32>
      %c0_72 = arith.constant 0 : index
      %c0_73 = arith.constant 0 : index
      %c0_74 = arith.constant 0 : index
      %104 = vector.load %arg9[%c0_72, %c0_73, %c0_74] : memref<2x8x1xf32, #tpu.memory_space<vmem>>, vector<2x8x1xf32>
      tpu.vector_store %arg9[%c0_72, %c0_73, %c0_74], %103 {strides = array<i32>} : memref<2x8x1xf32, #tpu.memory_space<vmem>>, vector<2x8x1xf32>,
      %cst_75 = arith.constant 0.000000e+00 : f32
      %105 = vector.broadcast %cst_75 : f32 to vector<2x8x16xf32>
      %c0_76 = arith.constant 0 : index
      %c0_77 = arith.constant 0 : index
      %c0_78 = arith.constant 0 : index
      %106 = vector.load %arg10[%c0_76, %c0_77, %c0_78] : memref<2x8x16xf32, #tpu.memory_space<vmem>>, vector<2x8x16xf32>
      tpu.vector_store %arg10[%c0_76, %c0_77, %c0_78], %105 {strides = array<i32>} : memref<2x8x16xf32, #tpu.memory_space<vmem>>, vector<2x8x16xf32>,
    } else {
    }
    %c0 = arith.constant 0 : index
    %c0_1 = arith.constant 0 : index
    %c0_2 = arith.constant 0 : index
    %c0_3 = arith.constant 0 : index
    %3 = vector.load %arg5[%c0, %c0_1, %c0_2, %c0_3] : memref<1x1x8x16xf32, #tpu.memory_space<vmem>>, vector<1x1x8x16xf32>
    %4 = vector.shape_cast %3 : vector<1x1x8x16xf32> to vector<8x16xf32>
    %5 = arith.truncf %4 : vector<8x16xf32> to vector<8x16xbf16>
    %c0_4 = arith.constant 0 : index
    %c0_5 = arith.constant 0 : index
    %c0_6 = arith.constant 0 : index
    %c0_7 = arith.constant 0 : index
    %6 = vector.load %arg6[%c0_4, %c0_5, %c0_6, %c0_7] : memref<1x1x8x16xf32, #tpu.memory_space<vmem>>, vector<1x1x8x16xf32>
    %7 = vector.shape_cast %6 : vector<1x1x8x16xf32> to vector<8x16xf32>
    %8 = arith.truncf %7 : vector<8x16xf32> to vector<8x16xbf16>
    %c8_i32 = arith.constant 8 : i32
    %9 = arith.muli %arg2, %c8_i32 : i32
    %10 = tpu.iota {dimensions = array<i32: 0>} : vector<8x8xi32>
    %11 = vector.broadcast %9 : i32 to vector<8x8xi32>
    %12 = arith.addi %11, %10 : vector<8x8xi32>
    %c8_i32_8 = arith.constant 8 : i32
    %13 = arith.muli %arg3, %c8_i32_8 : i32
    %14 = tpu.iota {dimensions = array<i32: 1>} : vector<8x8xi32>
    %15 = vector.broadcast %13 : i32 to vector<8x8xi32>
    %16 = arith.addi %15, %14 : vector<8x8xi32>
    %17 = arith.cmpi sge, %12, %16 : vector<8x8xi32>
    %c0_9 = arith.constant 0 : index
    %c0_10 = arith.constant 0 : index
    %c0_11 = arith.constant 0 : index
    %c0_12 = arith.constant 0 : index
    %c0_13 = arith.constant 0 : index
    %18 = vector.load %arg4[%c0_9, %c0_10, %c0_11, %c0_12, %c0_13] : memref<1x1x2x8x16xf32, #tpu.memory_space<vmem>>, vector<1x1x1x8x16xf32>
    %19 = vector.shape_cast %18 : vector<1x1x1x8x16xf32> to vector<8x16xf32>
    %cst = arith.constant 2.500000e-01 : f32
    %20 = vector.broadcast %cst : f32 to vector<8x16xf32>
    %21 = arith.mulf %19, %20 : vector<8x16xf32>
    %22 = arith.truncf %21 : vector<8x16xf32> to vector<8x16xbf16>
    %cst_14 = arith.constant dense<0.000000e+00> : vector<8x8xf32>
    %23 = tpu.matmul %22, %5, %cst_14 {dimension_numbers = #tpu.dot_dimension_numbers<[1], [1], [0], [0], [0, 0, 1, 0], [], []>} : vector<8x16xbf16>, vector<8x16xbf16>, vector<8x8xf32> -> vector<8x8xf32>
    %cst_15 = arith.constant -1.000000e+09 : f32
    %24 = vector.broadcast %cst_15 : f32 to vector<8x8xf32>
    %25 = arith.select %17, %24, %23 : vector<8x8xi1>, vector<8x8xf32>
    %c0_16 = arith.constant 0 : index
    %c0_17 = arith.constant 0 : index
    %c0_18 = arith.constant 0 : index
    %26 = vector.load %arg8[%c0_16, %c0_17, %c0_18] : memref<2x8x1xf32, #tpu.memory_space<vmem>>, vector<1x8x1xf32>
    %27 = vector.shape_cast %26 : vector<1x8x1xf32> to vector<8x1xf32>
    %cst_19 = arith.constant dense<0xFF800000> : vector<8xf32>
    %28 = vector.multi_reduction <maximumf>, %25, %cst_19 [1] : vector<8x8xf32> to vector<8xf32>
    %29 = vector.shape_cast %28 : vector<8xf32> to vector<8x1xf32>
    %30 = arith.maximumf %27, %29 : vector<8x1xf32>
    %31 = arith.subf %27, %30 : vector<8x1xf32>
    %32 = math.exp %31 : vector<8x1xf32>
    %33 = vector.broadcast %30 : vector<8x1xf32> to vector<8x8xf32>
    %34 = arith.subf %25, %33 : vector<8x8xf32>
    %35 = math.exp %34 : vector<8x8xf32>
    %c0_20 = arith.constant 0 : index
    %c0_21 = arith.constant 0 : index
    %c0_22 = arith.constant 0 : index
    %36 = vector.load %arg9[%c0_20, %c0_21, %c0_22] : memref<2x8x1xf32, #tpu.memory_space<vmem>>, vector<1x8x1xf32>
    %37 = vector.shape_cast %36 : vector<1x8x1xf32> to vector<8x1xf32>
    %38 = arith.mulf %32, %37 : vector<8x1xf32>
    %cst_23 = arith.constant dense<0.000000e+00> : vector<8xf32>
    %39 = vector.multi_reduction <add>, %35, %cst_23 [1] : vector<8x8xf32> to vector<8xf32>
    %40 = vector.shape_cast %39 : vector<8xf32> to vector<8x1xf32>
    %41 = arith.addf %38, %40 : vector<8x1xf32>
    %c0_24 = arith.constant 0 : index
    %c0_25 = arith.constant 0 : index
    %c0_26 = arith.constant 0 : index
    %42 = vector.load %arg9[%c0_24, %c0_25, %c0_26] : memref<2x8x1xf32, #tpu.memory_space<vmem>>, vector<1x8x1xf32>
    %43 = vector.shape_cast %42 : vector<1x8x1xf32> to vector<8x1xf32>
    %44 = vector.shape_cast %41 : vector<8x1xf32> to vector<1x8x1xf32>
    tpu.vector_store %arg9[%c0_24, %c0_25, %c0_26], %44 {strides = array<i32>} : memref<2x8x1xf32, #tpu.memory_space<vmem>>, vector<1x8x1xf32>,
    %c0_27 = arith.constant 0 : index
    %c0_28 = arith.constant 0 : index
    %c0_29 = arith.constant 0 : index
    %45 = vector.load %arg10[%c0_27, %c0_28, %c0_29] : memref<2x8x16xf32, #tpu.memory_space<vmem>>, vector<1x8x16xf32>
    %46 = vector.shape_cast %45 : vector<1x8x16xf32> to vector<8x16xf32>
    %47 = vector.broadcast %32 : vector<8x1xf32> to vector<8x16xf32>
    %48 = arith.mulf %47, %46 : vector<8x16xf32>
    %49 = arith.truncf %35 : vector<8x8xf32> to vector<8x8xbf16>
    %cst_30 = arith.constant dense<0.000000e+00> : vector<8x16xf32>
    %50 = tpu.matmul %49, %8, %cst_30 {dimension_numbers = #tpu.dot_dimension_numbers<[1], [0], [0], [1], [0, 0, 1, 1], [], []>} : vector<8x8xbf16>, vector<8x16xbf16>, vector<8x16xf32> -> vector<8x16xf32>
    %51 = arith.addf %48, %50 : vector<8x16xf32>
    %c0_31 = arith.constant 0 : index
    %c0_32 = arith.constant 0 : index
    %c0_33 = arith.constant 0 : index
    %52 = vector.load %arg10[%c0_31, %c0_32, %c0_33] : memref<2x8x16xf32, #tpu.memory_space<vmem>>, vector<1x8x16xf32>
    %53 = vector.shape_cast %52 : vector<1x8x16xf32> to vector<8x16xf32>
    %54 = vector.shape_cast %51 : vector<8x16xf32> to vector<1x8x16xf32>
    tpu.vector_store %arg10[%c0_31, %c0_32, %c0_33], %54 {strides = array<i32>} : memref<2x8x16xf32, #tpu.memory_space<vmem>>, vector<1x8x16xf32>,
    %c0_34 = arith.constant 0 : index
    %c0_35 = arith.constant 0 : index
    %c0_36 = arith.constant 0 : index
    %55 = vector.load %arg8[%c0_34, %c0_35, %c0_36] : memref<2x8x1xf32, #tpu.memory_space<vmem>>, vector<1x8x1xf32>
    %56 = vector.shape_cast %55 : vector<1x8x1xf32> to vector<8x1xf32>
    %57 = vector.shape_cast %30 : vector<8x1xf32> to vector<1x8x1xf32>
    tpu.vector_store %arg8[%c0_34, %c0_35, %c0_36], %57 {strides = array<i32>} : memref<2x8x1xf32, #tpu.memory_space<vmem>>, vector<1x8x1xf32>,
    %c0_37 = arith.constant 0 : index
    %c0_38 = arith.constant 0 : index
    %c1 = arith.constant 1 : index
    %c0_39 = arith.constant 0 : index
    %c0_40 = arith.constant 0 : index
    %58 = vector.load %arg4[%c0_37, %c0_38, %c1, %c0_39, %c0_40] : memref<1x1x2x8x16xf32, #tpu.memory_space<vmem>>, vector<1x1x1x8x16xf32>
    %59 = vector.shape_cast %58 : vector<1x1x1x8x16xf32> to vector<8x16xf32>
    %cst_41 = arith.constant 2.500000e-01 : f32
    %60 = vector.broadcast %cst_41 : f32 to vector<8x16xf32>
    %61 = arith.mulf %59, %60 : vector<8x16xf32>
    %62 = arith.truncf %61 : vector<8x16xf32> to vector<8x16xbf16>
    %cst_42 = arith.constant dense<0.000000e+00> : vector<8x8xf32>
    %63 = tpu.matmul %62, %5, %cst_42 {dimension_numbers = #tpu.dot_dimension_numbers<[1], [1], [0], [0], [0, 0, 1, 0], [], []>} : vector<8x16xbf16>, vector<8x16xbf16>, vector<8x8xf32> -> vector<8x8xf32>
    %cst_43 = arith.constant -1.000000e+09 : f32
    %64 = vector.broadcast %cst_43 : f32 to vector<8x8xf32>
    %65 = arith.select %17, %64, %63 : vector<8x8xi1>, vector<8x8xf32>
    %c1_44 = arith.constant 1 : index
    %c0_45 = arith.constant 0 : index
    %c0_46 = arith.constant 0 : index
    %66 = vector.load %arg8[%c1_44, %c0_45, %c0_46] : memref<2x8x1xf32, #tpu.memory_space<vmem>>, vector<1x8x1xf32>
    %67 = vector.shape_cast %66 : vector<1x8x1xf32> to vector<8x1xf32>
    %cst_47 = arith.constant dense<0xFF800000> : vector<8xf32>
    %68 = vector.multi_reduction <maximumf>, %65, %cst_47 [1] : vector<8x8xf32> to vector<8xf32>
    %69 = vector.shape_cast %68 : vector<8xf32> to vector<8x1xf32>
    %70 = arith.maximumf %67, %69 : vector<8x1xf32>
    %71 = arith.subf %67, %70 : vector<8x1xf32>
    %72 = math.exp %71 : vector<8x1xf32>
    %73 = vector.broadcast %70 : vector<8x1xf32> to vector<8x8xf32>
    %74 = arith.subf %65, %73 : vector<8x8xf32>
    %75 = math.exp %74 : vector<8x8xf32>
    %c1_48 = arith.constant 1 : index
    %c0_49 = arith.constant 0 : index
    %c0_50 = arith.constant 0 : index
    %76 = vector.load %arg9[%c1_48, %c0_49, %c0_50] : memref<2x8x1xf32, #tpu.memory_space<vmem>>, vector<1x8x1xf32>
    %77 = vector.shape_cast %76 : vector<1x8x1xf32> to vector<8x1xf32>
    %78 = arith.mulf %72, %77 : vector<8x1xf32>
    %cst_51 = arith.constant dense<0.000000e+00> : vector<8xf32>
    %79 = vector.multi_reduction <add>, %75, %cst_51 [1] : vector<8x8xf32> to vector<8xf32>
    %80 = vector.shape_cast %79 : vector<8xf32> to vector<8x1xf32>
    %81 = arith.addf %78, %80 : vector<8x1xf32>
    %c1_52 = arith.constant 1 : index
    %c0_53 = arith.constant 0 : index
    %c0_54 = arith.constant 0 : index
    %82 = vector.load %arg9[%c1_52, %c0_53, %c0_54] : memref<2x8x1xf32, #tpu.memory_space<vmem>>, vector<1x8x1xf32>
    %83 = vector.shape_cast %82 : vector<1x8x1xf32> to vector<8x1xf32>
    %84 = vector.shape_cast %81 : vector<8x1xf32> to vector<1x8x1xf32>
    tpu.vector_store %arg9[%c1_52, %c0_53, %c0_54], %84 {strides = array<i32>} : memref<2x8x1xf32, #tpu.memory_space<vmem>>, vector<1x8x1xf32>,
    %c1_55 = arith.constant 1 : index
    %c0_56 = arith.constant 0 : index
    %c0_57 = arith.constant 0 : index
    %85 = vector.load %arg10[%c1_55, %c0_56, %c0_57] : memref<2x8x16xf32, #tpu.memory_space<vmem>>, vector<1x8x16xf32>
    %86 = vector.shape_cast %85 : vector<1x8x16xf32> to vector<8x16xf32>
    %87 = vector.broadcast %72 : vector<8x1xf32> to vector<8x16xf32>
    %88 = arith.mulf %87, %86 : vector<8x16xf32>
    %89 = arith.truncf %75 : vector<8x8xf32> to vector<8x8xbf16>
    %cst_58 = arith.constant dense<0.000000e+00> : vector<8x16xf32>
    %90 = tpu.matmul %89, %8, %cst_58 {dimension_numbers = #tpu.dot_dimension_numbers<[1], [0], [0], [1], [0, 0, 1, 1], [], []>} : vector<8x8xbf16>, vector<8x16xbf16>, vector<8x16xf32> -> vector<8x16xf32>
    %91 = arith.addf %88, %90 : vector<8x16xf32>
    %c1_59 = arith.constant 1 : index
    %c0_60 = arith.constant 0 : index
    %c0_61 = arith.constant 0 : index
    %92 = vector.load %arg10[%c1_59, %c0_60, %c0_61] : memref<2x8x16xf32, #tpu.memory_space<vmem>>, vector<1x8x16xf32>
    %93 = vector.shape_cast %92 : vector<1x8x16xf32> to vector<8x16xf32>
    %94 = vector.shape_cast %91 : vector<8x16xf32> to vector<1x8x16xf32>
    tpu.vector_store %arg10[%c1_59, %c0_60, %c0_61], %94 {strides = array<i32>} : memref<2x8x16xf32, #tpu.memory_space<vmem>>, vector<1x8x16xf32>,
    %c1_62 = arith.constant 1 : index
    %c0_63 = arith.constant 0 : index
    %c0_64 = arith.constant 0 : index
    %95 = vector.load %arg8[%c1_62, %c0_63, %c0_64] : memref<2x8x1xf32, #tpu.memory_space<vmem>>, vector<1x8x1xf32>
    %96 = vector.shape_cast %95 : vector<1x8x1xf32> to vector<8x1xf32>
    %97 = vector.shape_cast %70 : vector<8x1xf32> to vector<1x8x1xf32>
    tpu.vector_store %arg8[%c1_62, %c0_63, %c0_64], %97 {strides = array<i32>} : memref<2x8x1xf32, #tpu.memory_space<vmem>>, vector<1x8x1xf32>,
    %c0_i32_65 = arith.constant 0 : i32
    %98 = arith.cmpi eq, %arg3, %c0_i32_65 : i32
    %99 = arith.extui %98 : i1 to i32
    %c0_i32_66 = arith.constant 0 : i32
    %100 = arith.cmpi ne, %99, %c0_i32_66 : i32
    scf.if %100 {
      %c0_67 = arith.constant 0 : index
      %c0_68 = arith.constant 0 : index
      %c0_69 = arith.constant 0 : index
      %101 = vector.load %arg9[%c0_67, %c0_68, %c0_69] : memref<2x8x1xf32, #tpu.memory_space<vmem>>, vector<2x8x1xf32>
      %102 = tpu.reciprocal %101 {approx = true} : vector<2x8x1xf32> -> vector<2x8x1xf32>
      %c0_70 = arith.constant 0 : index
      %c0_71 = arith.constant 0 : index
      %c0_72 = arith.constant 0 : index
      %103 = vector.load %arg10[%c0_70, %c0_71, %c0_72] : memref<2x8x16xf32, #tpu.memory_space<vmem>>, vector<2x8x16xf32>
      %104 = vector.broadcast %102 : vector<2x8x1xf32> to vector<2x8x16xf32>
      %105 = arith.mulf %103, %104 : vector<2x8x16xf32>
      %c0_73 = arith.constant 0 : index
      %c0_74 = arith.constant 0 : index
      %c0_75 = arith.constant 0 : index
      %c0_76 = arith.constant 0 : index
      %c0_77 = arith.constant 0 : index
      %106 = vector.load %arg7[%c0_73, %c0_74, %c0_75, %c0_76, %c0_77] : memref<1x1x2x8x16xf32, #tpu.memory_space<vmem>>, vector<1x1x2x8x16xf32>
      %107 = vector.shape_cast %106 : vector<1x1x2x8x16xf32> to vector<2x8x16xf32>
      %108 = vector.shape_cast %105 : vector<2x8x16xf32> to vector<1x1x2x8x16xf32>
      tpu.vector_store %arg7[%c0_73, %c0_74, %c0_75, %c0_76, %c0_77], %108 {strides = array<i32>} : memref<1x1x2x8x16xf32, #tpu.memory_space<vmem>>, vector<1x1x2x8x16xf32>,
    } else {
    }
    return
  }
  func.func @transform_0(%arg0: i32, %arg1: i32, %arg2: i32, %arg3: i32) -> (i32, i32, i32, i32, i32) {
    %c0_i32 = arith.constant 0 : i32
    %c0_i32_0 = arith.constant 0 : i32
    %c0_i32_1 = arith.constant 0 : i32
    return %arg0, %arg1, %c0_i32, %arg2, %c0_i32_0 : i32, i32, i32, i32, i32
  }
  func.func @transform_1(%arg0: i32, %arg1: i32, %arg2: i32, %arg3: i32) -> (i32, i32, i32, i32) {
    %c0_i32 = arith.constant 0 : i32
    %c0_i32_0 = arith.constant 0 : i32
    return %arg0, %arg1, %arg3, %c0_i32 : i32, i32, i32, i32
  }
  func.func @transform_2(%arg0: i32, %arg1: i32, %arg2: i32, %arg3: i32) -> (i32, i32, i32, i32) {
    %c0_i32 = arith.constant 0 : i32
    %c0_i32_0 = arith.constant 0 : i32
    return %arg0, %arg1, %arg3, %c0_i32 : i32, i32, i32, i32
  }
  func.func @transform_3(%arg0: i32, %arg1: i32, %arg2: i32, %arg3: i32) -> (i32, i32, i32, i32, i32) {
    %c0_i32 = arith.constant 0 : i32
    %c0_i32_0 = arith.constant 0 : i32
    %c0_i32_1 = arith.constant 0 : i32
    return %arg0, %arg1, %c0_i32, %arg2, %c0_i32_0 : i32, i32, i32, i32, i32
  }
}

module attributes {stable_mosaic.version = 11 : i64} {
  func.func @_ln_matmul_bias_kernel(%arg0: i32, %arg1: i32, %arg2: memref<16x64xf32, #tpu.memory_space<vmem>>, %arg3: memref<1x64xf32, #tpu.memory_space<vmem>>, %arg4: memref<1x64xf32, #tpu.memory_space<vmem>>, %arg5: memref<128x64xbf16, #tpu.memory_space<vmem>>, %arg6: memref<1x128xf32, #tpu.memory_space<vmem>>, %arg7: memref<16x128xf32, #tpu.memory_space<vmem>>) attributes {dimension_semantics = [#tpu.dimension_semantics<parallel>, #tpu.dimension_semantics<parallel>], iteration_bounds = array<i64: 1, 1>, scalar_prefetch = 0 : i64, scratch_operands = 0 : i64, tpu.core_type = #tpu.core_type<tc>, window_params = [{transform_indices = @transform_0, window_bounds = array<i64: 16, 64>}, {pipeline_mode = #tpu.pipeline_mode<synchronous>, transform_indices = @transform_1, window_bounds = array<i64: 1, 64>}, {pipeline_mode = #tpu.pipeline_mode<synchronous>, transform_indices = @transform_2, window_bounds = array<i64: 1, 64>}, {transform_indices = @transform_3, window_bounds = array<i64: 128, 64>}, {transform_indices = @transform_4, window_bounds = array<i64: 1, 128>}, {transform_indices = @transform_5, window_bounds = array<i64: 16, 128>}]} {
    %c0 = arith.constant 0 : index
    %c0_0 = arith.constant 0 : index
    %0 = vector.load %arg2[%c0, %c0_0] : memref<16x64xf32, #tpu.memory_space<vmem>>, vector<16x64xf32>
    %cst = arith.constant dense<0.000000e+00> : vector<16xf32>
    %1 = vector.multi_reduction <add>, %0, %cst [1] : vector<16x64xf32> to vector<16xf32>
    %2 = vector.shape_cast %1 : vector<16xf32> to vector<16x1xf32>
    %cst_1 = arith.constant 6.400000e+01 : f32
    %3 = vector.broadcast %cst_1 : f32 to vector<16x1xf32>
    %4 = arith.divf %2, %3 : vector<16x1xf32>
    %5 = vector.broadcast %4 : vector<16x1xf32> to vector<16x64xf32>
    %6 = arith.subf %0, %5 : vector<16x64xf32>
    %7 = arith.mulf %6, %6 : vector<16x64xf32>
    %cst_2 = arith.constant dense<0.000000e+00> : vector<16xf32>
    %8 = vector.multi_reduction <add>, %7, %cst_2 [1] : vector<16x64xf32> to vector<16xf32>
    %9 = vector.shape_cast %8 : vector<16xf32> to vector<16x1xf32>
    %cst_3 = arith.constant 6.400000e+01 : f32
    %10 = vector.broadcast %cst_3 : f32 to vector<16x1xf32>
    %11 = arith.divf %9, %10 : vector<16x1xf32>
    %12 = vector.broadcast %4 : vector<16x1xf32> to vector<16x64xf32>
    %13 = arith.subf %0, %12 : vector<16x64xf32>
    %cst_4 = arith.constant 9.99999974E-6 : f32
    %14 = vector.broadcast %cst_4 : f32 to vector<16x1xf32>
    %15 = arith.addf %11, %14 : vector<16x1xf32>
    %16 = math.rsqrt %15 : vector<16x1xf32>
    %17 = vector.broadcast %16 : vector<16x1xf32> to vector<16x64xf32>
    %18 = arith.mulf %13, %17 : vector<16x64xf32>
    %c0_5 = arith.constant 0 : index
    %c0_6 = arith.constant 0 : index
    %19 = vector.load %arg3[%c0_5, %c0_6] : memref<1x64xf32, #tpu.memory_space<vmem>>, vector<1x64xf32>
    %20 = vector.broadcast %19 : vector<1x64xf32> to vector<16x64xf32>
    %21 = arith.mulf %18, %20 : vector<16x64xf32>
    %c0_7 = arith.constant 0 : index
    %c0_8 = arith.constant 0 : index
    %22 = vector.load %arg4[%c0_7, %c0_8] : memref<1x64xf32, #tpu.memory_space<vmem>>, vector<1x64xf32>
    %23 = vector.broadcast %22 : vector<1x64xf32> to vector<16x64xf32>
    %24 = arith.addf %21, %23 : vector<16x64xf32>
    %25 = arith.truncf %24 : vector<16x64xf32> to vector<16x64xbf16>
    %c0_9 = arith.constant 0 : index
    %c0_10 = arith.constant 0 : index
    %26 = vector.load %arg5[%c0_9, %c0_10] : memref<128x64xbf16, #tpu.memory_space<vmem>>, vector<128x64xbf16>
    %cst_11 = arith.constant dense<0.000000e+00> : vector<16x128xf32>
    %27 = tpu.matmul %25, %26, %cst_11 {dimension_numbers = #tpu.dot_dimension_numbers<[1], [1], [0], [0], [0, 0, 1, 0], [], []>} : vector<16x64xbf16>, vector<128x64xbf16>, vector<16x128xf32> -> vector<16x128xf32>
    %c0_12 = arith.constant 0 : index
    %c0_13 = arith.constant 0 : index
    %28 = vector.load %arg6[%c0_12, %c0_13] : memref<1x128xf32, #tpu.memory_space<vmem>>, vector<1x128xf32>
    %29 = vector.broadcast %28 : vector<1x128xf32> to vector<16x128xf32>
    %30 = arith.addf %27, %29 : vector<16x128xf32>
    %c0_14 = arith.constant 0 : index
    %c0_15 = arith.constant 0 : index
    %31 = vector.load %arg7[%c0_14, %c0_15] : memref<16x128xf32, #tpu.memory_space<vmem>>, vector<16x128xf32>
    tpu.vector_store %arg7[%c0_14, %c0_15], %30 {strides = array<i32>} : memref<16x128xf32, #tpu.memory_space<vmem>>, vector<16x128xf32>,
    return
  }
  func.func @transform_0(%arg0: i32, %arg1: i32) -> (i32, i32) {
    %c0_i32 = arith.constant 0 : i32
    %c0_i32_0 = arith.constant 0 : i32
    return %arg0, %c0_i32 : i32, i32
  }
  func.func @transform_1(%arg0: i32, %arg1: i32) -> (i32, i32) {
    %c0_i32 = arith.constant 0 : i32
    %c0_i32_0 = arith.constant 0 : i32
    %c0_i32_1 = arith.constant 0 : i32
    return %c0_i32, %c0_i32_0 : i32, i32
  }
  func.func @transform_2(%arg0: i32, %arg1: i32) -> (i32, i32) {
    %c0_i32 = arith.constant 0 : i32
    %c0_i32_0 = arith.constant 0 : i32
    %c0_i32_1 = arith.constant 0 : i32
    return %c0_i32, %c0_i32_0 : i32, i32
  }
  func.func @transform_3(%arg0: i32, %arg1: i32) -> (i32, i32) {
    %c0_i32 = arith.constant 0 : i32
    %c0_i32_0 = arith.constant 0 : i32
    return %arg1, %c0_i32 : i32, i32
  }
  func.func @transform_4(%arg0: i32, %arg1: i32) -> (i32, i32) {
    %c0_i32 = arith.constant 0 : i32
    %c0_i32_0 = arith.constant 0 : i32
    return %c0_i32, %arg1 : i32, i32
  }
  func.func @transform_5(%arg0: i32, %arg1: i32) -> (i32, i32) {
    %c0_i32 = arith.constant 0 : i32
    return %arg0, %arg1 : i32, i32
  }
}

module attributes {stable_mosaic.version = 11 : i64} {
  func.func @_matmul_bias_res_kernel(%arg0: i32, %arg1: i32, %arg2: i32, %arg3: memref<16x64xbf16, #tpu.memory_space<vmem>>, %arg4: memref<64x64xbf16, #tpu.memory_space<vmem>>, %arg5: memref<1x64xf32, #tpu.memory_space<vmem>>, %arg6: memref<16x64xf32, #tpu.memory_space<vmem>>, %arg7: memref<16x64xf32, #tpu.memory_space<vmem>>, %arg8: memref<16x64xf32, #tpu.memory_space<vmem>>) attributes {dimension_semantics = [#tpu.dimension_semantics<parallel>, #tpu.dimension_semantics<parallel>, #tpu.dimension_semantics<arbitrary>], iteration_bounds = array<i64: 1, 1, 1>, scalar_prefetch = 0 : i64, scratch_operands = 1 : i64, tpu.core_type = #tpu.core_type<tc>, window_params = [{transform_indices = @transform_0, window_bounds = array<i64: 16, 64>}, {transform_indices = @transform_1, window_bounds = array<i64: 64, 64>}, {transform_indices = @transform_2, window_bounds = array<i64: 1, 64>}, {transform_indices = @transform_3, window_bounds = array<i64: 16, 64>}, {transform_indices = @transform_4, window_bounds = array<i64: 16, 64>}]} {
    %c0_i32 = arith.constant 0 : i32
    %0 = arith.cmpi eq, %arg2, %c0_i32 : i32
    %1 = arith.extui %0 : i1 to i32
    %c0_i32_0 = arith.constant 0 : i32
    %2 = arith.cmpi ne, %1, %c0_i32_0 : i32
    scf.if %2 {
      %cst_10 = arith.constant 0.000000e+00 : f32
      %12 = vector.broadcast %cst_10 : f32 to vector<16x64xf32>
      %c0_11 = arith.constant 0 : index
      %c0_12 = arith.constant 0 : index
      %13 = vector.load %arg8[%c0_11, %c0_12] : memref<16x64xf32, #tpu.memory_space<vmem>>, vector<16x64xf32>
      tpu.vector_store %arg8[%c0_11, %c0_12], %12 {strides = array<i32>} : memref<16x64xf32, #tpu.memory_space<vmem>>, vector<16x64xf32>,
    } else {
    }
    %c0 = arith.constant 0 : index
    %c0_1 = arith.constant 0 : index
    %3 = vector.load %arg8[%c0, %c0_1] : memref<16x64xf32, #tpu.memory_space<vmem>>, vector<16x64xf32>
    %c0_2 = arith.constant 0 : index
    %c0_3 = arith.constant 0 : index
    %4 = vector.load %arg3[%c0_2, %c0_3] : memref<16x64xbf16, #tpu.memory_space<vmem>>, vector<16x64xbf16>
    %c0_4 = arith.constant 0 : index
    %c0_5 = arith.constant 0 : index
    %5 = vector.load %arg4[%c0_4, %c0_5] : memref<64x64xbf16, #tpu.memory_space<vmem>>, vector<64x64xbf16>
    %cst = arith.constant dense<0.000000e+00> : vector<16x64xf32>
    %6 = tpu.matmul %4, %5, %cst {dimension_numbers = #tpu.dot_dimension_numbers<[1], [1], [0], [0], [0, 0, 1, 0], [], []>} : vector<16x64xbf16>, vector<64x64xbf16>, vector<16x64xf32> -> vector<16x64xf32>
    %7 = arith.addf %3, %6 : vector<16x64xf32>
    %c0_6 = arith.constant 0 : index
    %c0_7 = arith.constant 0 : index
    %8 = vector.load %arg8[%c0_6, %c0_7] : memref<16x64xf32, #tpu.memory_space<vmem>>, vector<16x64xf32>
    tpu.vector_store %arg8[%c0_6, %c0_7], %7 {strides = array<i32>} : memref<16x64xf32, #tpu.memory_space<vmem>>, vector<16x64xf32>,
    %c0_i32_8 = arith.constant 0 : i32
    %9 = arith.cmpi eq, %arg2, %c0_i32_8 : i32
    %10 = arith.extui %9 : i1 to i32
    %c0_i32_9 = arith.constant 0 : i32
    %11 = arith.cmpi ne, %10, %c0_i32_9 : i32
    scf.if %11 {
      %c0_10 = arith.constant 0 : index
      %c0_11 = arith.constant 0 : index
      %12 = vector.load %arg8[%c0_10, %c0_11] : memref<16x64xf32, #tpu.memory_space<vmem>>, vector<16x64xf32>
      %c0_12 = arith.constant 0 : index
      %c0_13 = arith.constant 0 : index
      %13 = vector.load %arg5[%c0_12, %c0_13] : memref<1x64xf32, #tpu.memory_space<vmem>>, vector<1x64xf32>
      %14 = vector.broadcast %13 : vector<1x64xf32> to vector<16x64xf32>
      %15 = arith.addf %12, %14 : vector<16x64xf32>
      %c0_14 = arith.constant 0 : index
      %c0_15 = arith.constant 0 : index
      %16 = vector.load %arg6[%c0_14, %c0_15] : memref<16x64xf32, #tpu.memory_space<vmem>>, vector<16x64xf32>
      %17 = arith.addf %15, %16 : vector<16x64xf32>
      %c0_16 = arith.constant 0 : index
      %c0_17 = arith.constant 0 : index
      %18 = vector.load %arg7[%c0_16, %c0_17] : memref<16x64xf32, #tpu.memory_space<vmem>>, vector<16x64xf32>
      tpu.vector_store %arg7[%c0_16, %c0_17], %17 {strides = array<i32>} : memref<16x64xf32, #tpu.memory_space<vmem>>, vector<16x64xf32>,
    } else {
    }
    return
  }
  func.func @transform_0(%arg0: i32, %arg1: i32, %arg2: i32) -> (i32, i32) {
    %c0_i32 = arith.constant 0 : i32
    return %arg0, %arg2 : i32, i32
  }
  func.func @transform_1(%arg0: i32, %arg1: i32, %arg2: i32) -> (i32, i32) {
    %c0_i32 = arith.constant 0 : i32
    return %arg1, %arg2 : i32, i32
  }
  func.func @transform_2(%arg0: i32, %arg1: i32, %arg2: i32) -> (i32, i32) {
    %c0_i32 = arith.constant 0 : i32
    %c0_i32_0 = arith.constant 0 : i32
    return %c0_i32, %arg1 : i32, i32
  }
  func.func @transform_3(%arg0: i32, %arg1: i32, %arg2: i32) -> (i32, i32) {
    %c0_i32 = arith.constant 0 : i32
    return %arg0, %arg1 : i32, i32
  }
  func.func @transform_4(%arg0: i32, %arg1: i32, %arg2: i32) -> (i32, i32) {
    %c0_i32 = arith.constant 0 : i32
    return %arg0, %arg1 : i32, i32
  }
}

module attributes {stable_mosaic.version = 11 : i64} {
  func.func @_ln_swiglu_res_kernel(%arg0: i32, %arg1: i32, %arg2: memref<16x64xf32, #tpu.memory_space<vmem>>, %arg3: memref<1x64xf32, #tpu.memory_space<vmem>>, %arg4: memref<1x64xf32, #tpu.memory_space<vmem>>, %arg5: memref<256x64xbf16, #tpu.memory_space<vmem>>, %arg6: memref<256x64xbf16, #tpu.memory_space<vmem>>, %arg7: memref<64x256xbf16, #tpu.memory_space<vmem>>, %arg8: memref<16x64xf32, #tpu.memory_space<vmem>>, %arg9: memref<16x64xf32, #tpu.memory_space<vmem>>) attributes {dimension_semantics = [#tpu.dimension_semantics<parallel>, #tpu.dimension_semantics<arbitrary>], iteration_bounds = array<i64: 1, 1>, scalar_prefetch = 0 : i64, scratch_operands = 1 : i64, tpu.core_type = #tpu.core_type<tc>, window_params = [{transform_indices = @transform_0, window_bounds = array<i64: 16, 64>}, {pipeline_mode = #tpu.pipeline_mode<synchronous>, transform_indices = @transform_1, window_bounds = array<i64: 1, 64>}, {pipeline_mode = #tpu.pipeline_mode<synchronous>, transform_indices = @transform_2, window_bounds = array<i64: 1, 64>}, {transform_indices = @transform_3, window_bounds = array<i64: 256, 64>}, {transform_indices = @transform_4, window_bounds = array<i64: 256, 64>}, {transform_indices = @transform_5, window_bounds = array<i64: 64, 256>}, {transform_indices = @transform_6, window_bounds = array<i64: 16, 64>}]} {
    %c0 = arith.constant 0 : index
    %c0_0 = arith.constant 0 : index
    %0 = vector.load %arg2[%c0, %c0_0] : memref<16x64xf32, #tpu.memory_space<vmem>>, vector<16x64xf32>
    %cst = arith.constant dense<0.000000e+00> : vector<16xf32>
    %1 = vector.multi_reduction <add>, %0, %cst [1] : vector<16x64xf32> to vector<16xf32>
    %2 = vector.shape_cast %1 : vector<16xf32> to vector<16x1xf32>
    %cst_1 = arith.constant 6.400000e+01 : f32
    %3 = vector.broadcast %cst_1 : f32 to vector<16x1xf32>
    %4 = arith.divf %2, %3 : vector<16x1xf32>
    %5 = vector.broadcast %4 : vector<16x1xf32> to vector<16x64xf32>
    %6 = arith.subf %0, %5 : vector<16x64xf32>
    %7 = arith.mulf %6, %6 : vector<16x64xf32>
    %cst_2 = arith.constant dense<0.000000e+00> : vector<16xf32>
    %8 = vector.multi_reduction <add>, %7, %cst_2 [1] : vector<16x64xf32> to vector<16xf32>
    %9 = vector.shape_cast %8 : vector<16xf32> to vector<16x1xf32>
    %cst_3 = arith.constant 6.400000e+01 : f32
    %10 = vector.broadcast %cst_3 : f32 to vector<16x1xf32>
    %11 = arith.divf %9, %10 : vector<16x1xf32>
    %12 = vector.broadcast %4 : vector<16x1xf32> to vector<16x64xf32>
    %13 = arith.subf %0, %12 : vector<16x64xf32>
    %cst_4 = arith.constant 9.99999974E-6 : f32
    %14 = vector.broadcast %cst_4 : f32 to vector<16x1xf32>
    %15 = arith.addf %11, %14 : vector<16x1xf32>
    %16 = math.rsqrt %15 : vector<16x1xf32>
    %17 = vector.broadcast %16 : vector<16x1xf32> to vector<16x64xf32>
    %18 = arith.mulf %13, %17 : vector<16x64xf32>
    %c0_5 = arith.constant 0 : index
    %c0_6 = arith.constant 0 : index
    %19 = vector.load %arg3[%c0_5, %c0_6] : memref<1x64xf32, #tpu.memory_space<vmem>>, vector<1x64xf32>
    %20 = vector.broadcast %19 : vector<1x64xf32> to vector<16x64xf32>
    %21 = arith.mulf %18, %20 : vector<16x64xf32>
    %c0_7 = arith.constant 0 : index
    %c0_8 = arith.constant 0 : index
    %22 = vector.load %arg4[%c0_7, %c0_8] : memref<1x64xf32, #tpu.memory_space<vmem>>, vector<1x64xf32>
    %23 = vector.broadcast %22 : vector<1x64xf32> to vector<16x64xf32>
    %24 = arith.addf %21, %23 : vector<16x64xf32>
    %25 = arith.truncf %24 : vector<16x64xf32> to vector<16x64xbf16>
    %c0_9 = arith.constant 0 : index
    %c0_10 = arith.constant 0 : index
    %26 = vector.load %arg5[%c0_9, %c0_10] : memref<256x64xbf16, #tpu.memory_space<vmem>>, vector<256x64xbf16>
    %cst_11 = arith.constant dense<0.000000e+00> : vector<16x256xf32>
    %27 = tpu.matmul %25, %26, %cst_11 {dimension_numbers = #tpu.dot_dimension_numbers<[1], [1], [0], [0], [0, 0, 1, 0], [], []>} : vector<16x64xbf16>, vector<256x64xbf16>, vector<16x256xf32> -> vector<16x256xf32>
    %c0_12 = arith.constant 0 : index
    %c0_13 = arith.constant 0 : index
    %28 = vector.load %arg6[%c0_12, %c0_13] : memref<256x64xbf16, #tpu.memory_space<vmem>>, vector<256x64xbf16>
    %cst_14 = arith.constant dense<0.000000e+00> : vector<16x256xf32>
    %29 = tpu.matmul %25, %28, %cst_14 {dimension_numbers = #tpu.dot_dimension_numbers<[1], [1], [0], [0], [0, 0, 1, 0], [], []>} : vector<16x64xbf16>, vector<256x64xbf16>, vector<16x256xf32> -> vector<16x256xf32>
    %30 = arith.negf %27 : vector<16x256xf32>
    %31 = math.exp %30 : vector<16x256xf32>
    %cst_15 = arith.constant 1.000000e+00 : f32
    %32 = vector.broadcast %cst_15 : f32 to vector<16x256xf32>
    %33 = arith.addf %32, %31 : vector<16x256xf32>
    %34 = arith.divf %32, %33 : vector<16x256xf32>
    %35 = arith.mulf %27, %34 : vector<16x256xf32>
    %36 = arith.mulf %35, %29 : vector<16x256xf32>
    %37 = arith.truncf %36 : vector<16x256xf32> to vector<16x256xbf16>
    %c0_i32 = arith.constant 0 : i32
    %38 = arith.cmpi eq, %arg1, %c0_i32 : i32
    %39 = arith.extui %38 : i1 to i32
    %c0_i32_16 = arith.constant 0 : i32
    %40 = arith.cmpi ne, %39, %c0_i32_16 : i32
    scf.if %40 {
      %c0_26 = arith.constant 0 : index
      %c0_27 = arith.constant 0 : index
      %49 = vector.load %arg9[%c0_26, %c0_27] : memref<16x64xf32, #tpu.memory_space<vmem>>, vector<16x64xf32>
      tpu.vector_store %arg9[%c0_26, %c0_27], %0 {strides = array<i32>} : memref<16x64xf32, #tpu.memory_space<vmem>>, vector<16x64xf32>,
    } else {
    }
    %c0_17 = arith.constant 0 : index
    %c0_18 = arith.constant 0 : index
    %41 = vector.load %arg9[%c0_17, %c0_18] : memref<16x64xf32, #tpu.memory_space<vmem>>, vector<16x64xf32>
    %c0_19 = arith.constant 0 : index
    %c0_20 = arith.constant 0 : index
    %42 = vector.load %arg7[%c0_19, %c0_20] : memref<64x256xbf16, #tpu.memory_space<vmem>>, vector<64x256xbf16>
    %cst_21 = arith.constant dense<0.000000e+00> : vector<16x64xf32>
    %43 = tpu.matmul %37, %42, %cst_21 {dimension_numbers = #tpu.dot_dimension_numbers<[1], [1], [0], [0], [0, 0, 1, 0], [], []>} : vector<16x256xbf16>, vector<64x256xbf16>, vector<16x64xf32> -> vector<16x64xf32>
    %44 = arith.addf %41, %43 : vector<16x64xf32>
    %c0_22 = arith.constant 0 : index
    %c0_23 = arith.constant 0 : index
    %45 = vector.load %arg9[%c0_22, %c0_23] : memref<16x64xf32, #tpu.memory_space<vmem>>, vector<16x64xf32>
    tpu.vector_store %arg9[%c0_22, %c0_23], %44 {strides = array<i32>} : memref<16x64xf32, #tpu.memory_space<vmem>>, vector<16x64xf32>,
    %c0_i32_24 = arith.constant 0 : i32
    %46 = arith.cmpi eq, %arg1, %c0_i32_24 : i32
    %47 = arith.extui %46 : i1 to i32
    %c0_i32_25 = arith.constant 0 : i32
    %48 = arith.cmpi ne, %47, %c0_i32_25 : i32
    scf.if %48 {
      %c0_26 = arith.constant 0 : index
      %c0_27 = arith.constant 0 : index
      %49 = vector.load %arg9[%c0_26, %c0_27] : memref<16x64xf32, #tpu.memory_space<vmem>>, vector<16x64xf32>
      %c0_28 = arith.constant 0 : index
      %c0_29 = arith.constant 0 : index
      %50 = vector.load %arg8[%c0_28, %c0_29] : memref<16x64xf32, #tpu.memory_space<vmem>>, vector<16x64xf32>
      tpu.vector_store %arg8[%c0_28, %c0_29], %49 {strides = array<i32>} : memref<16x64xf32, #tpu.memory_space<vmem>>, vector<16x64xf32>,
    } else {
    }
    return
  }
  func.func @transform_0(%arg0: i32, %arg1: i32) -> (i32, i32) {
    %c0_i32 = arith.constant 0 : i32
    %c0_i32_0 = arith.constant 0 : i32
    return %arg0, %c0_i32 : i32, i32
  }
  func.func @transform_1(%arg0: i32, %arg1: i32) -> (i32, i32) {
    %c0_i32 = arith.constant 0 : i32
    %c0_i32_0 = arith.constant 0 : i32
    %c0_i32_1 = arith.constant 0 : i32
    return %c0_i32, %c0_i32_0 : i32, i32
  }
  func.func @transform_2(%arg0: i32, %arg1: i32) -> (i32, i32) {
    %c0_i32 = arith.constant 0 : i32
    %c0_i32_0 = arith.constant 0 : i32
    %c0_i32_1 = arith.constant 0 : i32
    return %c0_i32, %c0_i32_0 : i32, i32
  }
  func.func @transform_3(%arg0: i32, %arg1: i32) -> (i32, i32) {
    %c0_i32 = arith.constant 0 : i32
    %c0_i32_0 = arith.constant 0 : i32
    return %arg1, %c0_i32 : i32, i32
  }
  func.func @transform_4(%arg0: i32, %arg1: i32) -> (i32, i32) {
    %c0_i32 = arith.constant 0 : i32
    %c0_i32_0 = arith.constant 0 : i32
    return %arg1, %c0_i32 : i32, i32
  }
  func.func @transform_5(%arg0: i32, %arg1: i32) -> (i32, i32) {
    %c0_i32 = arith.constant 0 : i32
    %c0_i32_0 = arith.constant 0 : i32
    return %c0_i32, %arg1 : i32, i32
  }
  func.func @transform_6(%arg0: i32, %arg1: i32) -> (i32, i32) {
    %c0_i32 = arith.constant 0 : i32
    %c0_i32_0 = arith.constant 0 : i32
    return %arg0, %c0_i32 : i32, i32
  }
}

module attributes {stable_mosaic.version = 11 : i64} {
  func.func @_layernorm_kernel(%arg0: i32, %arg1: memref<16x64xf32, #tpu.memory_space<vmem>>, %arg2: memref<1x64xf32, #tpu.memory_space<vmem>>, %arg3: memref<1x64xf32, #tpu.memory_space<vmem>>, %arg4: memref<16x64xf32, #tpu.memory_space<vmem>>) attributes {dimension_semantics = [#tpu.dimension_semantics<parallel>], iteration_bounds = array<i64: 1>, scalar_prefetch = 0 : i64, scratch_operands = 0 : i64, tpu.core_type = #tpu.core_type<tc>, window_params = [{transform_indices = @transform_0, window_bounds = array<i64: 16, 64>}, {pipeline_mode = #tpu.pipeline_mode<synchronous>, transform_indices = @transform_1, window_bounds = array<i64: 1, 64>}, {pipeline_mode = #tpu.pipeline_mode<synchronous>, transform_indices = @transform_2, window_bounds = array<i64: 1, 64>}, {transform_indices = @transform_3, window_bounds = array<i64: 16, 64>}]} {
    %c0 = arith.constant 0 : index
    %c0_0 = arith.constant 0 : index
    %0 = vector.load %arg1[%c0, %c0_0] : memref<16x64xf32, #tpu.memory_space<vmem>>, vector<16x64xf32>
    %cst = arith.constant dense<0.000000e+00> : vector<16xf32>
    %1 = vector.multi_reduction <add>, %0, %cst [1] : vector<16x64xf32> to vector<16xf32>
    %2 = vector.shape_cast %1 : vector<16xf32> to vector<16x1xf32>
    %cst_1 = arith.constant 6.400000e+01 : f32
    %3 = vector.broadcast %cst_1 : f32 to vector<16x1xf32>
    %4 = arith.divf %2, %3 : vector<16x1xf32>
    %5 = vector.broadcast %4 : vector<16x1xf32> to vector<16x64xf32>
    %6 = arith.subf %0, %5 : vector<16x64xf32>
    %7 = arith.mulf %6, %6 : vector<16x64xf32>
    %cst_2 = arith.constant dense<0.000000e+00> : vector<16xf32>
    %8 = vector.multi_reduction <add>, %7, %cst_2 [1] : vector<16x64xf32> to vector<16xf32>
    %9 = vector.shape_cast %8 : vector<16xf32> to vector<16x1xf32>
    %cst_3 = arith.constant 6.400000e+01 : f32
    %10 = vector.broadcast %cst_3 : f32 to vector<16x1xf32>
    %11 = arith.divf %9, %10 : vector<16x1xf32>
    %12 = vector.broadcast %4 : vector<16x1xf32> to vector<16x64xf32>
    %13 = arith.subf %0, %12 : vector<16x64xf32>
    %cst_4 = arith.constant 9.99999974E-6 : f32
    %14 = vector.broadcast %cst_4 : f32 to vector<16x1xf32>
    %15 = arith.addf %11, %14 : vector<16x1xf32>
    %16 = math.rsqrt %15 : vector<16x1xf32>
    %17 = vector.broadcast %16 : vector<16x1xf32> to vector<16x64xf32>
    %18 = arith.mulf %13, %17 : vector<16x64xf32>
    %c0_5 = arith.constant 0 : index
    %c0_6 = arith.constant 0 : index
    %19 = vector.load %arg2[%c0_5, %c0_6] : memref<1x64xf32, #tpu.memory_space<vmem>>, vector<1x64xf32>
    %20 = vector.broadcast %19 : vector<1x64xf32> to vector<16x64xf32>
    %21 = arith.mulf %18, %20 : vector<16x64xf32>
    %c0_7 = arith.constant 0 : index
    %c0_8 = arith.constant 0 : index
    %22 = vector.load %arg3[%c0_7, %c0_8] : memref<1x64xf32, #tpu.memory_space<vmem>>, vector<1x64xf32>
    %23 = vector.broadcast %22 : vector<1x64xf32> to vector<16x64xf32>
    %24 = arith.addf %21, %23 : vector<16x64xf32>
    %c0_9 = arith.constant 0 : index
    %c0_10 = arith.constant 0 : index
    %25 = vector.load %arg4[%c0_9, %c0_10] : memref<16x64xf32, #tpu.memory_space<vmem>>, vector<16x64xf32>
    tpu.vector_store %arg4[%c0_9, %c0_10], %24 {strides = array<i32>} : memref<16x64xf32, #tpu.memory_space<vmem>>, vector<16x64xf32>,
    return
  }
  func.func @transform_0(%arg0: i32) -> (i32, i32) {
    %c0_i32 = arith.constant 0 : i32
    %c0_i32_0 = arith.constant 0 : i32
    return %arg0, %c0_i32 : i32, i32
  }
  func.func @transform_1(%arg0: i32) -> (i32, i32) {
    %c0_i32 = arith.constant 0 : i32
    %c0_i32_0 = arith.constant 0 : i32
    %c0_i32_1 = arith.constant 0 : i32
    return %c0_i32, %c0_i32_0 : i32, i32
  }
  func.func @transform_2(%arg0: i32) -> (i32, i32) {
    %c0_i32 = arith.constant 0 : i32
    %c0_i32_0 = arith.constant 0 : i32
    %c0_i32_1 = arith.constant 0 : i32
    return %c0_i32, %c0_i32_0 : i32, i32
  }
  func.func @transform_3(%arg0: i32) -> (i32, i32) {
    %c0_i32 = arith.constant 0 : i32
    %c0_i32_0 = arith.constant 0 : i32
    return %arg0, %c0_i32 : i32, i32
  }
}

module attributes {stable_mosaic.version = 11 : i64} {
  func.func @_matmul_kernel(%arg0: i32, %arg1: i32, %arg2: i32, %arg3: memref<16x64xbf16, #tpu.memory_space<vmem>>, %arg4: memref<256x64xbf16, #tpu.memory_space<vmem>>, %arg5: memref<16x256xf32, #tpu.memory_space<vmem>>, %arg6: memref<16x256xf32, #tpu.memory_space<vmem>>) attributes {dimension_semantics = [#tpu.dimension_semantics<parallel>, #tpu.dimension_semantics<parallel>, #tpu.dimension_semantics<arbitrary>], iteration_bounds = array<i64: 1, 1, 1>, scalar_prefetch = 0 : i64, scratch_operands = 1 : i64, tpu.core_type = #tpu.core_type<tc>, window_params = [{transform_indices = @transform_0, window_bounds = array<i64: 16, 64>}, {transform_indices = @transform_1, window_bounds = array<i64: 256, 64>}, {transform_indices = @transform_2, window_bounds = array<i64: 16, 256>}]} {
    %c0_i32 = arith.constant 0 : i32
    %0 = arith.cmpi eq, %arg2, %c0_i32 : i32
    %1 = arith.extui %0 : i1 to i32
    %c0_i32_0 = arith.constant 0 : i32
    %2 = arith.cmpi ne, %1, %c0_i32_0 : i32
    scf.if %2 {
      %cst_10 = arith.constant 0.000000e+00 : f32
      %12 = vector.broadcast %cst_10 : f32 to vector<16x256xf32>
      %c0_11 = arith.constant 0 : index
      %c0_12 = arith.constant 0 : index
      %13 = vector.load %arg6[%c0_11, %c0_12] : memref<16x256xf32, #tpu.memory_space<vmem>>, vector<16x256xf32>
      tpu.vector_store %arg6[%c0_11, %c0_12], %12 {strides = array<i32>} : memref<16x256xf32, #tpu.memory_space<vmem>>, vector<16x256xf32>,
    } else {
    }
    %c0 = arith.constant 0 : index
    %c0_1 = arith.constant 0 : index
    %3 = vector.load %arg6[%c0, %c0_1] : memref<16x256xf32, #tpu.memory_space<vmem>>, vector<16x256xf32>
    %c0_2 = arith.constant 0 : index
    %c0_3 = arith.constant 0 : index
    %4 = vector.load %arg3[%c0_2, %c0_3] : memref<16x64xbf16, #tpu.memory_space<vmem>>, vector<16x64xbf16>
    %c0_4 = arith.constant 0 : index
    %c0_5 = arith.constant 0 : index
    %5 = vector.load %arg4[%c0_4, %c0_5] : memref<256x64xbf16, #tpu.memory_space<vmem>>, vector<256x64xbf16>
    %cst = arith.constant dense<0.000000e+00> : vector<16x256xf32>
    %6 = tpu.matmul %4, %5, %cst {dimension_numbers = #tpu.dot_dimension_numbers<[1], [1], [0], [0], [0, 0, 1, 0], [], []>} : vector<16x64xbf16>, vector<256x64xbf16>, vector<16x256xf32> -> vector<16x256xf32>
    %7 = arith.addf %3, %6 : vector<16x256xf32>
    %c0_6 = arith.constant 0 : index
    %c0_7 = arith.constant 0 : index
    %8 = vector.load %arg6[%c0_6, %c0_7] : memref<16x256xf32, #tpu.memory_space<vmem>>, vector<16x256xf32>
    tpu.vector_store %arg6[%c0_6, %c0_7], %7 {strides = array<i32>} : memref<16x256xf32, #tpu.memory_space<vmem>>, vector<16x256xf32>,
    %c0_i32_8 = arith.constant 0 : i32
    %9 = arith.cmpi eq, %arg2, %c0_i32_8 : i32
    %10 = arith.extui %9 : i1 to i32
    %c0_i32_9 = arith.constant 0 : i32
    %11 = arith.cmpi ne, %10, %c0_i32_9 : i32
    scf.if %11 {
      %c0_10 = arith.constant 0 : index
      %c0_11 = arith.constant 0 : index
      %12 = vector.load %arg6[%c0_10, %c0_11] : memref<16x256xf32, #tpu.memory_space<vmem>>, vector<16x256xf32>
      %c0_12 = arith.constant 0 : index
      %c0_13 = arith.constant 0 : index
      %13 = vector.load %arg5[%c0_12, %c0_13] : memref<16x256xf32, #tpu.memory_space<vmem>>, vector<16x256xf32>
      tpu.vector_store %arg5[%c0_12, %c0_13], %12 {strides = array<i32>} : memref<16x256xf32, #tpu.memory_space<vmem>>, vector<16x256xf32>,
    } else {
    }
    return
  }
  func.func @transform_0(%arg0: i32, %arg1: i32, %arg2: i32) -> (i32, i32) {
    %c0_i32 = arith.constant 0 : i32
    return %arg0, %arg2 : i32, i32
  }
  func.func @transform_1(%arg0: i32, %arg1: i32, %arg2: i32) -> (i32, i32) {
    %c0_i32 = arith.constant 0 : i32
    return %arg1, %arg2 : i32, i32
  }
  func.func @transform_2(%arg0: i32, %arg1: i32, %arg2: i32) -> (i32, i32) {
    %c0_i32 = arith.constant 0 : i32
    return %arg0, %arg1 : i32, i32
  }
}

</mosaic_0001>

<llo_original>
// kernel: jarvis_forward.11
$region0: #{jarvis_forward.11}
  #allocation0 [shape = 'u32[]', space=smem, size = 0x4, offset = 0x4, fixed_abs, tag = 'smem constant byte address 0x4 - core index']
  #allocation1 [shape = 'u32[72,128]{1,0:T(1,128)}', space=vmem, size = 0x9000, scoped, tag = 'internal scratch']
  #allocation2 [shape = 'f32[2,8,1]{2,1,0:T(8,128)}', space=vmem, size = 0x2000, scoped, tag = 'scratch operand']
  #allocation3 [shape = 'f32[2,8,1]{2,1,0:T(8,128)}', space=vmem, size = 0x2000, scoped, tag = 'scratch operand']
  #allocation4 [shape = 'f32[2,8,16]{2,1,0:T(8,128)}', space=vmem, size = 0x2000, scoped, tag = 'scratch operand']
  %s0 = inlined_call_operand.vmem [shape: f32[2,2,2,8,16], index: 0, kind: input, shape index: {}]
  %s1 = inlined_call_operand.vmem [shape: f32[2,2,8,16], index: 1, kind: input, shape index: {}]
  %s2 = inlined_call_operand.vmem [shape: f32[2,2,8,16], index: 2, kind: input, shape index: {}]
  %s3 = inlined_call_operand.vmem [shape: f32[2,2,2,8,16], index: 3, kind: output, shape index: {}]
  %s4 = sld [smem:[#allocation0]]
  $region53: #{jarvis_forward.11} parent=0
    _
  %s6 = ssub.s32 1, %s4
  %s7 = scalar_select 0, %s6, %s4
  loop: start=0, step=1, limit=6
  $region2: #{jarvis_forward.11} parent=0 // loop_pre_header
    _
  $region3: #{jarvis_forward.11} parent=0 // loop_header
    %s9 = sphi 0, %s13
    %p10 = scmp.ge.s32.totalorder %s9, 6
    %s16 = sphi 0, %s42
    %s17 = sphi 0, %s38
    %s18 = sphi 0, %s34
    %s19 = sphi 0, %s30
    %s20 = sphi 0, %s16
    %s21 = sphi 0, %s17
    %s22 = sphi 0, %s18
    %s23 = sphi 0, %s19
    %s24 = sphi 0, %s20
    %s25 = sphi 0, %s21
    %s26 = sphi 0, %s22
    %s27 = sphi 0, %s23
    %s49 = sphi 0, %s51
    %s52 = sphi 0, %s49
    %s53 = sphi 0, %s52
    %s69 = sphi 0, %s53
    %s79 = sphi 0, %s81
    %s82 = sphi 0, %s79
    %s83 = sphi 0, %s82
    %s99 = sphi 0, %s83
    %s109 = sphi 0, %s111
    %s112 = sphi 0, %s109
    %s113 = sphi 0, %s112
    %s129 = sphi 0, %s113
    %s139 = sphi 0, %s141
    %s142 = sphi 0, %s139
    %s143 = sphi 0, %s142
    %s159 = sphi 0, %s143
  $region4: #{jarvis_forward.11} parent=0 // loop_header_branch
    %12 = sbr.rel (%p10) target = $region8
  $region5: #{jarvis_forward.11} parent=0 // loop_body
    %s14 = ssub.s32 %s9, 1
    %s15 = ssub.s32 %s9, 2
    %s28 = sadd.s32 1, %s19
    %p29 = scmp.ge.s32.totalorder %s28, 1
    %s30 = scalar_select %p29, 0, %s28
    %s31 = sadd.s32 1, %s18
    %s32 = scalar_select %p29, %s31, %s18
    %p33 = scmp.ge.s32.totalorder %s32, 1
    %s34 = scalar_select %p33, 0, %s32
    %s35 = sadd.s32 1, %s17
    %s36 = scalar_select %p33, %s35, %s17
    %p37 = scmp.ge.s32.totalorder %s36, 2
    %s38 = scalar_select %p37, 0, %s36
    %s39 = sadd.s32 1, %s16
    %s40 = scalar_select %p37, %s39, %s16
    %p41 = scmp.ge.s32.totalorder %s40, 2
    %s42 = scalar_select %p41, 0, %s40
    %s43 = ssub.s32 %s16, %s42
    %s44 = ssub.s32 %s17, %s38
    %s45 = sor.u32 %s43, %s44
    %s46 = ssub.s32 %s18, %s34
    %s47 = sor.u32 %s45, %s46
    %p48 = scmp.eq.s32.totalorder %s47, 0
    %s50 = sadd.s32 %s49, 1
    %s51 = scalar_select %p48, %s49, %s50
    %p54 = pneg %p48
    %p55 = scmp.eq.s32.totalorder %s9, 3
    %p56 = por %p54, %p55
    %p57 = scmp.ne.s32.totalorder %s49, %s52
    %p58 = scmp.eq.s32.totalorder %s9, 0
    %p59 = por %p57, %p58
    %p60 = scmp.ne.s32.totalorder %s49, %s52
    %p61 = scmp.eq.s32.totalorder %s14, 3
    %p62 = por %p60, %p61
    %p63 = scmp.ne.s32.totalorder %s52, %s53
    %p64 = scmp.eq.s32.totalorder %s14, 0
    %p65 = por %p63, %p64
    %p66 = scmp.ne.s32.totalorder %s52, %s53
    %p67 = scmp.eq.s32.totalorder %s15, 3
    %p68 = por %p66, %p67
    %p70 = scmp.ne.s32.totalorder %s53, %s69
    %p71 = scmp.eq.s32.totalorder %s15, 0
    %p72 = por %p70, %p71
    %s73 = ssub.s32 %s16, %s42
    %s74 = ssub.s32 %s17, %s38
    %s75 = sor.u32 %s73, %s74
    %s76 = ssub.s32 %s19, %s30
    %s77 = sor.u32 %s75, %s76
    %p78 = scmp.eq.s32.totalorder %s77, 0
    %s80 = sadd.s32 %s79, 1
    %s81 = scalar_select %p78, %s79, %s80
    %p84 = pneg %p78
    %p85 = scmp.eq.s32.totalorder %s9, 3
    %p86 = por %p84, %p85
    %p87 = scmp.ne.s32.totalorder %s79, %s82
    %p88 = scmp.eq.s32.totalorder %s9, 0
    %p89 = por %p87, %p88
    %p90 = scmp.ne.s32.totalorder %s79, %s82
    %p91 = scmp.eq.s32.totalorder %s14, 3
    %p92 = por %p90, %p91
    %p93 = scmp.ne.s32.totalorder %s82, %s83
    %p94 = scmp.eq.s32.totalorder %s14, 0
    %p95 = por %p93, %p94
    %p96 = scmp.ne.s32.totalorder %s82, %s83
    %p97 = scmp.eq.s32.totalorder %s15, 3
    %p98 = por %p96, %p97
    %p100 = scmp.ne.s32.totalorder %s83, %s99
    %p101 = scmp.eq.s32.totalorder %s15, 0
    %p102 = por %p100, %p101
    %s103 = ssub.s32 %s16, %s42
    %s104 = ssub.s32 %s17, %s38
    %s105 = sor.u32 %s103, %s104
    %s106 = ssub.s32 %s19, %s30
    %s107 = sor.u32 %s105, %s106
    %p108 = scmp.eq.s32.totalorder %s107, 0
    %s110 = sadd.s32 %s109, 1
    %s111 = scalar_select %p108, %s109, %s110
    %p114 = pneg %p108
    %p115 = scmp.eq.s32.totalorder %s9, 3
    %p116 = por %p114, %p115
    %p117 = scmp.ne.s32.totalorder %s109, %s112
    %p118 = scmp.eq.s32.totalorder %s9, 0
    %p119 = por %p117, %p118
    %p120 = scmp.ne.s32.totalorder %s109, %s112
    %p121 = scmp.eq.s32.totalorder %s14, 3
    %p122 = por %p120, %p121
    %p123 = scmp.ne.s32.totalorder %s112, %s113
    %p124 = scmp.eq.s32.totalorder %s14, 0
    %p125 = por %p123, %p124
    %p126 = scmp.ne.s32.totalorder %s112, %s113
    %p127 = scmp.eq.s32.totalorder %s15, 3
    %p128 = por %p126, %p127
    %p130 = scmp.ne.s32.totalorder %s113, %s129
    %p131 = scmp.eq.s32.totalorder %s15, 0
    %p132 = por %p130, %p131
    %s133 = ssub.s32 %s16, %s42
    %s134 = ssub.s32 %s17, %s38
    %s135 = sor.u32 %s133, %s134
    %s136 = ssub.s32 %s18, %s34
    %s137 = sor.u32 %s135, %s136
    %p138 = scmp.eq.s32.totalorder %s137, 0
    %s140 = sadd.s32 %s139, 1
    %s141 = scalar_select %p138, %s139, %s140
    %p144 = pneg %p138
    %p145 = scmp.eq.s32.totalorder %s9, 3
    %p146 = por %p144, %p145
    %p147 = scmp.ne.s32.totalorder %s139, %s142
    %p148 = scmp.eq.s32.totalorder %s9, 0
    %p149 = por %p147, %p148
    %p150 = scmp.ne.s32.totalorder %s139, %s142
    %p151 = scmp.eq.s32.totalorder %s14, 3
    %p152 = por %p150, %p151
    %p153 = scmp.ne.s32.totalorder %s142, %s143
    %p154 = scmp.eq.s32.totalorder %s14, 0
    %p155 = por %p153, %p154
    %p156 = scmp.ne.s32.totalorder %s142, %s143
    %p157 = scmp.eq.s32.totalorder %s15, 3
    %p158 = por %p156, %p157
    %p160 = scmp.ne.s32.totalorder %s143, %s159
    %p161 = scmp.eq.s32.totalorder %s15, 0
    %p162 = por %p160, %p161
    %p163 = scmp.le.s32.totalorder 1, %s9
    %p164 = scmp.lt.s32.totalorder %s9, 5
    %p165 = pnand %p163, %p164
    %p166 = pneg %p165
    // Predicated region
    $region9: #{jarvis_forward.11} parent=5 // pred_check
      _
    $region10: #{jarvis_forward.11} parent=5 // pred_check_branch
      %168 = sbr.rel (%p165) target = $region12
    $region11: #{jarvis_forward.11} parent=5 // pred_region
      %s169 = ssub.s32 %s9, 1
    $region12: #{jarvis_forward.11} parent=5 // pred_fallthru
      _
    %p170 = scmp.lt.s32.totalorder %s9, 4
    // Predicated region
    $region13: #{jarvis_forward.11} parent=5 // pred_check
      %p171 = pneg %p170
    $region14: #{jarvis_forward.11} parent=5 // pred_check_branch
      %173 = sbr.rel (%p171) target = $region16
    $region15: #{jarvis_forward.11} parent=5 // pred_region
      // Predicated region
      $region17: #{jarvis_forward.11} parent=15 // pred_check
        %p174 = pneg %p59
      $region18: #{jarvis_forward.11} parent=15 // pred_check_branch
        %176 = sbr.rel (%p174) target = $region20
      $region19: #{jarvis_forward.11} parent=15 // pred_region
        %p177 = scmp.lt.s32.totalorder %s16, 1
        %s178 = scalar_select %p177, %s16, 1
        %p179 = scmp.lt.s32.totalorder %s17, 1
        %s180 = scalar_select %p179, %s17, 1
        %p181 = scmp.lt.s32.totalorder %s18, 0
        %s182 = scalar_select %p181, %s18, 0
        %s183 = smul.addr %s180, 2
        %s184 = sadd.s32 %s182, %s183
        %s185 = smul.addr %s178, 4
        %s186 = sadd.s32 %s184, %s185
        %s187 = smul.addr %s186, 8
        %s188 = scalar_lea.vmem %s0, %s187
      $region20: #{jarvis_forward.11} parent=15 // pred_fallthru
        _
      // Predicated region
      $region21: #{jarvis_forward.11} parent=15 // pred_check
        %p189 = pneg %p89
      $region22: #{jarvis_forward.11} parent=15 // pred_check_branch
        %191 = sbr.rel (%p189) target = $region24
      $region23: #{jarvis_forward.11} parent=15 // pred_region
        %p192 = scmp.lt.s32.totalorder %s16, 1
        %s193 = scalar_select %p192, %s16, 1
        %p194 = scmp.lt.s32.totalorder %s17, 1
        %s195 = scalar_select %p194, %s17, 1
        %p196 = scmp.lt.s32.totalorder %s19, 0
        %s197 = scalar_select %p196, %s19, 0
        %s198 = sadd.s32 %s197, %s195
        %s199 = smul.addr %s193, 2
        %s200 = sadd.s32 %s198, %s199
        %s201 = smul.addr %s200, 8
        %s202 = scalar_lea.vmem %s1, %s201
      $region24: #{jarvis_forward.11} parent=15 // pred_fallthru
        _
      // Predicated region
      $region25: #{jarvis_forward.11} parent=15 // pred_check
        %p203 = pneg %p119
      $region26: #{jarvis_forward.11} parent=15 // pred_check_branch
        %205 = sbr.rel (%p203) target = $region28
      $region27: #{jarvis_forward.11} parent=15 // pred_region
        %p206 = scmp.lt.s32.totalorder %s16, 1
        %s207 = scalar_select %p206, %s16, 1
        %p208 = scmp.lt.s32.totalorder %s17, 1
        %s209 = scalar_select %p208, %s17, 1
        %p210 = scmp.lt.s32.totalorder %s19, 0
        %s211 = scalar_select %p210, %s19, 0
        %s212 = sadd.s32 %s211, %s209
        %s213 = smul.addr %s207, 2
        %s214 = sadd.s32 %s212, %s213
        %s215 = smul.addr %s214, 8
        %s216 = scalar_lea.vmem %s2, %s215
      $region28: #{jarvis_forward.11} parent=15 // pred_fallthru
        _
    $region16: #{jarvis_forward.11} parent=5 // pred_fallthru
      _
    %p217 = scmp.le.s32.totalorder 1, %s9
    %p218 = scmp.lt.s32.totalorder %s9, 5
    %p219 = pnand %p217, %p218
    %p220 = pneg %p219
    // Predicated region
    $region29: #{jarvis_forward.11} parent=5 // pred_check
      _
    $region30: #{jarvis_forward.11} parent=5 // pred_check_branch
      %222 = sbr.rel (%p219) target = $region32
    $region31: #{jarvis_forward.11} parent=5 // pred_region
      %s223 = ssub.s32 %s9, 1
      %p224 = scmp.lt.s32.totalorder %s20, 1
      %s225 = scalar_select %p224, %s20, 1
      %p226 = scmp.lt.s32.totalorder %s21, 1
      %s227 = scalar_select %p226, %s21, 1
      %p228 = scmp.lt.s32.totalorder %s22, 0
      %s229 = scalar_select %p228, %s22, 0
      %s230 = smul.addr %s227, 2
      %s231 = sadd.s32 %s229, %s230
      %s232 = smul.addr %s225, 4
      %s233 = sadd.s32 %s231, %s232
      %s234 = smul.addr %s233, 8
      %s235 = scalar_lea.vmem %s0, %s234
      %p236 = pneg %p65
      %p237 = pneg %p62
      %p238 = scmp.lt.s32.totalorder %s20, 1
      %s239 = scalar_select %p238, %s20, 1
      %p240 = scmp.lt.s32.totalorder %s21, 1
      %s241 = scalar_select %p240, %s21, 1
      %p242 = scmp.lt.s32.totalorder %s23, 0
      %s243 = scalar_select %p242, %s23, 0
      %s244 = sadd.s32 %s243, %s241
      %s245 = smul.addr %s239, 2
      %s246 = sadd.s32 %s244, %s245
      %s247 = smul.addr %s246, 8
      %s248 = scalar_lea.vmem %s1, %s247
      %p249 = pneg %p95
      %p250 = pneg %p92
      %p251 = scmp.lt.s32.totalorder %s20, 1
      %s252 = scalar_select %p251, %s20, 1
      %p253 = scmp.lt.s32.totalorder %s21, 1
      %s254 = scalar_select %p253, %s21, 1
      %p255 = scmp.lt.s32.totalorder %s23, 0
      %s256 = scalar_select %p255, %s23, 0
      %s257 = sadd.s32 %s256, %s254
      %s258 = smul.addr %s252, 2
      %s259 = sadd.s32 %s257, %s258
      %s260 = smul.addr %s259, 8
      %s261 = scalar_lea.vmem %s2, %s260
      %p262 = pneg %p125
      %p263 = pneg %p122
      %p264 = pneg %p155
      %p265 = pneg %p152
      %p266 = scmp.lt.s32.totalorder %s20, 1
      %s267 = scalar_select %p266, %s20, 1
      %p268 = scmp.lt.s32.totalorder %s21, 1
      %s269 = scalar_select %p268, %s21, 1
      %p270 = scmp.lt.s32.totalorder %s22, 0
      %s271 = scalar_select %p270, %s22, 0
      %s272 = smul.addr %s269, 2
      %s273 = sadd.s32 %s271, %s272
      %s274 = smul.addr %s267, 4
      %s275 = sadd.s32 %s273, %s274
      %s276 = smul.addr %s275, 8
      %s277 = scalar_lea.vmem %s3, %s276
      %p278 = scmp.lt.s32.totalorder %s20, 1
      %s279 = scalar_select %p278, %s20, 1
      %p280 = scmp.lt.s32.totalorder %s21, 1
      %s281 = scalar_select %p280, %s21, 1
      %p282 = scmp.lt.s32.totalorder %s22, 0
      %s283 = scalar_select %p282, %s22, 0
      %s284 = smul.addr %s281, 2
      %s285 = sadd.s32 %s283, %s284
      %s286 = smul.addr %s279, 4
      %s287 = sadd.s32 %s285, %s286
      %s288 = smul.addr %s287, 8
      %s289 = scalar_lea.vmem %s0, %s288
      %p290 = scmp.lt.s32.totalorder %s20, 1
      %s291 = scalar_select %p290, %s20, 1
      %p292 = scmp.lt.s32.totalorder %s21, 1
      %s293 = scalar_select %p292, %s21, 1
      %p294 = scmp.lt.s32.totalorder %s23, 0
      %s295 = scalar_select %p294, %s23, 0
      %s296 = sadd.s32 %s295, %s293
      %s297 = smul.addr %s291, 2
      %s298 = sadd.s32 %s296, %s297
      %s299 = smul.addr %s298, 8
      %s300 = scalar_lea.vmem %s1, %s299
      %p301 = scmp.lt.s32.totalorder %s20, 1
      %s302 = scalar_select %p301, %s20, 1
      %p303 = scmp.lt.s32.totalorder %s21, 1
      %s304 = scalar_select %p303, %s21, 1
      %p305 = scmp.lt.s32.totalorder %s23, 0
      %s306 = scalar_select %p305, %s23, 0
      %s307 = sadd.s32 %s306, %s304
      %s308 = smul.addr %s302, 2
      %s309 = sadd.s32 %s307, %s308
      %s310 = smul.addr %s309, 8
      %s311 = scalar_lea.vmem %s2, %s310
      %p312 = scmp.lt.s32.totalorder %s20, 1
      %s313 = scalar_select %p312, %s20, 1
      %p314 = scmp.lt.s32.totalorder %s21, 1
      %s315 = scalar_select %p314, %s21, 1
      %p316 = scmp.lt.s32.totalorder %s22, 0
      %s317 = scalar_select %p316, %s22, 0
      %s318 = smul.addr %s315, 2
      %s319 = sadd.s32 %s317, %s318
      %s320 = smul.addr %s313, 4
      %s321 = sadd.s32 %s319, %s320
      %s322 = smul.addr %s321, 8
      %s323 = scalar_lea.vmem %s3, %s322
      %p325 = scmp.eq.s32.totalorder %s23, 0
      // Predicated region
      $region33: #{jarvis_forward.11} parent=31 // pred_check
        %p326 = pneg %p325
      $region34: #{jarvis_forward.11} parent=31 // pred_check_branch
        %328 = sbr.rel (%p326) target = $region36
      $region35: #{jarvis_forward.11} parent=31 // pred_region
        %vm329 = vcmask 7168
        %330 = vst.msk [vmem:[#allocation2] sm:$0xff] %vm329, -inf
        %331 = vst.msk [vmem:[#allocation2 + $0x8] sm:$0xff] %vm329, -inf
        %332 = vst.msk [vmem:[#allocation3] sm:$0xff] %vm329, 0.0
        %333 = vst.msk [vmem:[#allocation3 + $0x8] sm:$0xff] %vm329, 0.0
        %vm334 = vcmask 130048
        %335 = vst.msk [vmem:[#allocation4] sm:$0xff] %vm334, 0.0
        %336 = vst.msk [vmem:[#allocation4 + $0x8] sm:$0xff] %vm334, 0.0
      $region36: #{jarvis_forward.11} parent=31 // pred_fallthru
        _
      %v337 = vld [vmem:[%s300] sm:$0xff]
      %v338 = vpack.c.bf16 %v337, %v337
      %v339 = vld [vmem:[%s311] sm:$0xff]
      %v340 = vpack.c.bf16 %v339, %v339
      %s341 = smul.u32 %s22, 8
      %v342 = vlaneseq
      %v343 = vshrl.u32 %v342, 7
      %v344 = vstv %s341
      %v345 = vadd.s32 %v344, %v343
      %s346 = smul.u32 %s23, 8
      %v347 = vlaneseq
      %v348 = vand.u32 %v347, 127
      %v349 = vstv %s346
      %v350 = vadd.s32 %v349, %v348
      %vm351 = vcmp.ge.s32.totalorder %v345, %v350
      %v352 = vld [vmem:[%s289] sm:$0xff]
      %v353 = vmul.f32 %v352, 0.25
      %v354 = vpack.c.bf16 %v353, %v353
      %vm355 = vcmask 130048
      %v357 = vsel %vm355, %v354, 0
      %v360 = vsel %vm355, %v338, 0
      %362 = vmatpush.bf16.xpose.msra.mxu0 0
      %363 = vmatpush.bf16.xpose.msra.mxu0 0
      %364 = vmatpush.bf16.xpose.msra.mxu0 0
      %365 = vmatpush.bf16.xpose.msra.mxu0 0
      %366 = vmatpush.bf16.xpose.msra.mxu0 0
      %367 = vmatpush.bf16.xpose.msra.mxu0 0
      %368 = vmatpush.bf16.xpose.msra.mxu0 0
      %369 = vmatpush.bf16.xpose.msra.mxu0 %v360
      %370 = vmatmul.bf16.gmra.mxu0 %v357
      %v371 = vpop.f32.mrf.mxu0
      %v372 = vadd.f32 0.0, %v371
      %v373 = vpop.f32.mrf.mxu0
      %374 = vdwg.mxu0
      %v375 = vsel %vm351, -1e+09, %v372
      %v376 = vld [vmem:[#allocation2] sm:$0xff]
      %vm377 = vcmask 64512
      %v378 = vsel %vm377, %v375, -inf
      %379 = vmax.xlane.f32.xlu0 %v378
      %v380 = vpop.xlane.xlu0 %379
      %v381 = vmax.f32 %v376, %v380
      %v382 = vsub.f32 %v376, %v381
      %v383 = vmul.f32 %v382, 1.442695
      %v384 = vpow.pop %v383
      %386 = vset.pattern.permute.xlu0 0
      %387 = vperm.xlu0 %386, %v381
      %v388 = vpop.permute.xlu0 %387
      %v390 = vsub.f32 %v375, %v388
      %v391 = vmul.f32 %v390, 1.442695
      %v392 = vpow.pop %v391
      %v393 = vld [vmem:[#allocation3] sm:$0xff]
      %v394 = vmul.f32 %v384, %v393
      %v395 = vsel %vm377, %v392, 0.0
      %396 = vadd.xlane.f32.xlu0 %v395
      %v397 = vpop.xlane.xlu0 %396
      %v398 = vadd.f32 %v394, %v397
      %vm399 = vcmask 7168
      %400 = vst.msk [vmem:[#allocation3] sm:$0xff] %vm399, %v398
      %v401 = vld [vmem:[#allocation4] sm:$0xff]
      %403 = vset.pattern.permute.xlu0 0
      %404 = vperm.xlu0 %403, %v384
      %v405 = vpop.permute.xlu0 %404
      %v407 = vmul.f32 %v405, %v401
      %v408 = vpack.c.bf16 %v392, %v392
      %v410 = vsel %vm377, %v408, 0
      %vm412 = vcmask 1043456
      %v414 = vsel %vm412, %v340, 0
      %416 = vmatpush.bf16.msra.mxu0 0
      %417 = vmatpush.bf16.msra.mxu0 0
      %418 = vmatpush.bf16.msra.mxu0 0
      %419 = vmatpush.bf16.msra.mxu0 0
      %420 = vmatpush.bf16.msra.mxu0 0
      %421 = vmatpush.bf16.msra.mxu0 0
      %422 = vmatpush.bf16.msra.mxu0 0
      %423 = vmatpush.bf16.msra.mxu0 %v414
      %424 = vmatmul.bf16.gmra.mxu0 %v410
      %v425 = vpop.f32.mrf.mxu0
      %v426 = vadd.f32 0.0, %v425
      %v427 = vpop.f32.mrf.mxu0
      %428 = vdwg.mxu0
      %v429 = vadd.f32 %v407, %v426
      %430 = vst.msk [vmem:[#allocation4] sm:$0xff] %vm355, %v429
      %431 = vst.msk [vmem:[#allocation2] sm:$0xff] %vm399, %v381
      %s432 = scalar_lea.vmem %s289, 8
      %v433 = vld [vmem:[%s432] sm:$0xff]
      %v434 = vmul.f32 %v433, 0.25
      %v435 = vpack.c.bf16 %v434, %v434
      %v437 = vsel %vm355, %v435, 0
      %439 = vmatpush.bf16.xpose.msra.mxu0 0
      %440 = vmatpush.bf16.xpose.msra.mxu0 0
      %441 = vmatpush.bf16.xpose.msra.mxu0 0
      %442 = vmatpush.bf16.xpose.msra.mxu0 0
      %443 = vmatpush.bf16.xpose.msra.mxu0 0
      %444 = vmatpush.bf16.xpose.msra.mxu0 0
      %445 = vmatpush.bf16.xpose.msra.mxu0 0
      %446 = vmatpush.bf16.xpose.msra.mxu0 %v360
      %447 = vmatmul.bf16.gmra.mxu0 %v437
      %v448 = vpop.f32.mrf.mxu0
      %v449 = vadd.f32 0.0, %v448
      %v450 = vpop.f32.mrf.mxu0
      %451 = vdwg.mxu0
      %v452 = vsel %vm351, -1e+09, %v449
      %s453 = scalar_lea.vmem [#allocation2], 8
      %v454 = vld [vmem:[%s453] sm:$0xff]
      %v455 = vsel %vm377, %v452, -inf
      %456 = vmax.xlane.f32.xlu0 %v455
      %v457 = vpop.xlane.xlu0 %456
      %v458 = vmax.f32 %v454, %v457
      %v459 = vsub.f32 %v454, %v458
      %v460 = vmul.f32 %v459, 1.442695
      %v461 = vpow.pop %v460
      %463 = vset.pattern.permute.xlu0 0
      %464 = vperm.xlu0 %463, %v458
      %v465 = vpop.permute.xlu0 %464
      %v467 = vsub.f32 %v452, %v465
      %v468 = vmul.f32 %v467, 1.442695
      %v469 = vpow.pop %v468
      %s470 = scalar_lea.vmem [#allocation3], 8
      %v471 = vld [vmem:[%s470] sm:$0xff]
      %v472 = vmul.f32 %v461, %v471
      %v473 = vsel %vm377, %v469, 0.0
      %474 = vadd.xlane.f32.xlu0 %v473
      %v475 = vpop.xlane.xlu0 %474
      %v476 = vadd.f32 %v472, %v475
      %477 = vst.msk [vmem:[%s470] sm:$0xff] %vm399, %v476
      %s478 = scalar_lea.vmem [#allocation4], 8
      %v479 = vld [vmem:[%s478] sm:$0xff]
      %481 = vset.pattern.permute.xlu0 0
      %482 = vperm.xlu0 %481, %v461
      %v483 = vpop.permute.xlu0 %482
      %v485 = vmul.f32 %v483, %v479
      %v486 = vpack.c.bf16 %v469, %v469
      %v488 = vsel %vm377, %v486, 0
      %490 = vmatpush.bf16.msra.mxu0 0
      %491 = vmatpush.bf16.msra.mxu0 0
      %492 = vmatpush.bf16.msra.mxu0 0
      %493 = vmatpush.bf16.msra.mxu0 0
      %494 = vmatpush.bf16.msra.mxu0 0
      %495 = vmatpush.bf16.msra.mxu0 0
      %496 = vmatpush.bf16.msra.mxu0 0
      %497 = vmatpush.bf16.msra.mxu0 %v414
      %498 = vmatmul.bf16.gmra.mxu0 %v488
      %v499 = vpop.f32.mrf.mxu0
      %v500 = vadd.f32 0.0, %v499
      %v501 = vpop.f32.mrf.mxu0
      %502 = vdwg.mxu0
      %v503 = vadd.f32 %v485, %v500
      %504 = vst.msk [vmem:[%s478] sm:$0xff] %vm355, %v503
      %505 = vst.msk [vmem:[%s453] sm:$0xff] %vm399, %v458
      // Predicated region
      $region37: #{jarvis_forward.11} parent=31 // pred_check
        %p506 = pneg %p325
      $region38: #{jarvis_forward.11} parent=31 // pred_check_branch
        %508 = sbr.rel (%p506) target = $region40
      $region39: #{jarvis_forward.11} parent=31 // pred_region
        %v509 = vld [vmem:[#allocation3] sm:$0xff]
        %v510 = vld [vmem:[#allocation3 + $0x8] sm:$0xff]
        %v511 = vrcp.pop %v509
        %v512 = vrcp.pop %v510
        %v513 = vld [vmem:[#allocation4] sm:$0xff]
        %v514 = vld [vmem:[#allocation4 + $0x8] sm:$0xff]
        %516 = vset.pattern.permute.xlu0 0
        %517 = vperm.xlu0 %516, %v511
        %v518 = vpop.permute.xlu0 %517
        %521 = vset.pattern.permute.xlu0 0
        %522 = vperm.xlu0 %521, %v512
        %v523 = vpop.permute.xlu0 %522
        %v525 = vmul.f32 %v513, %v518
        %v526 = vmul.f32 %v514, %v523
        %527 = vst.msk [vmem:[%s323] sm:$0xff] %vm355, %v525
        %528 = vst.msk [vmem:[%s323 + $0x8] sm:$0xff] %vm355, %v526
      $region40: #{jarvis_forward.11} parent=31 // pred_fallthru
        _
      %p529 = scmp.lt.s32.totalorder %s20, 1
      %s530 = scalar_select %p529, %s20, 1
      %p531 = scmp.lt.s32.totalorder %s21, 1
      %s532 = scalar_select %p531, %s21, 1
      %p533 = scmp.lt.s32.totalorder %s22, 0
      %s534 = scalar_select %p533, %s22, 0
      %s535 = smul.addr %s532, 2
      %s536 = sadd.s32 %s534, %s535
      %s537 = smul.addr %s530, 4
      %s538 = sadd.s32 %s536, %s537
      %s539 = smul.addr %s538, 8
      %s540 = scalar_lea.vmem %s3, %s539
      // Predicated region
      $region41: #{jarvis_forward.11} parent=31 // pred_check
        %p541 = pneg %p152
      $region42: #{jarvis_forward.11} parent=31 // pred_check_branch
        %543 = sbr.rel (%p541) target = $region44
      $region43: #{jarvis_forward.11} parent=31 // pred_region
        _
      $region44: #{jarvis_forward.11} parent=31 // pred_fallthru
        _
    $region32: #{jarvis_forward.11} parent=5 // pred_fallthru
      _
    %p544 = scmp.le.s32.totalorder 2, %s9
    // Predicated region
    $region45: #{jarvis_forward.11} parent=5 // pred_check
      %p545 = pneg %p544
    $region46: #{jarvis_forward.11} parent=5 // pred_check_branch
      %547 = sbr.rel (%p545) target = $region48
    $region47: #{jarvis_forward.11} parent=5 // pred_region
      %s548 = ssub.s32 %s9, 2
      // Predicated region
      $region49: #{jarvis_forward.11} parent=47 // pred_check
        %p549 = pneg %p158
      $region50: #{jarvis_forward.11} parent=47 // pred_check_branch
        %551 = sbr.rel (%p549) target = $region52
      $region51: #{jarvis_forward.11} parent=47 // pred_region
        %p552 = scmp.lt.s32.totalorder %s24, 1
        %s553 = scalar_select %p552, %s24, 1
        %p554 = scmp.lt.s32.totalorder %s25, 1
        %s555 = scalar_select %p554, %s25, 1
        %p556 = scmp.lt.s32.totalorder %s26, 0
        %s557 = scalar_select %p556, %s26, 0
        %s558 = smul.addr %s555, 2
        %s559 = sadd.s32 %s557, %s558
        %s560 = smul.addr %s553, 4
        %s561 = sadd.s32 %s559, %s560
        %s562 = smul.addr %s561, 8
        %s563 = scalar_lea.vmem %s3, %s562
      $region52: #{jarvis_forward.11} parent=47 // pred_fallthru
        _
    $region48: #{jarvis_forward.11} parent=5 // pred_fallthru
      _
  $region6: #{jarvis_forward.11} parent=0 // loop_footer
    %s13 = sadd.s32 1, %s9
  $region7: #{jarvis_forward.11} parent=0 // loop_footer_branch
    %8 = sbr.rel target = $region3
  $region8: #{jarvis_forward.11} parent=0 // loop_exit
    _

// kernel: jarvis_forward.10
$region0: #{jarvis_forward.10}
  #allocation0 [shape = 'u32[]', space=smem, size = 0x4, offset = 0x4, fixed_abs, tag = 'smem constant byte address 0x4 - core index']
  #allocation1 [shape = 'u32[72,128]{1,0:T(1,128)}', space=vmem, size = 0x9000, scoped, tag = 'internal scratch']
  %s0 = inlined_call_operand.vmem [shape: f32[16,64], index: 0, kind: input, shape index: {}]
  %s1 = inlined_call_operand.vmem [shape: f32[1,64], index: 1, kind: input, shape index: {}]
  %s2 = inlined_call_operand.vmem [shape: f32[1,64], index: 2, kind: input, shape index: {}]
  %s3 = inlined_call_operand.vmem [shape: bf16[128,64], index: 3, kind: input, shape index: {}]
  %s4 = inlined_call_operand.vmem [shape: f32[1,128], index: 4, kind: input, shape index: {}]
  %s5 = inlined_call_operand.vmem [shape: f32[16,128], index: 5, kind: output, shape index: {}]
  %s6 = sld [smem:[#allocation0]]
  $region30: #{jarvis_forward.10} parent=0
    _
  %s8 = ssub.s32 1, %s6
  %s9 = scalar_select 0, %s8, %s6
  // Predicated region
  $region2: #{jarvis_forward.10} parent=0 // pred_check
    _
  $region3: #{jarvis_forward.10} parent=0 // pred_check_branch
    %11 = sbr.rel (0) target = $region5
  $region4: #{jarvis_forward.10} parent=0 // pred_region
    _
  $region5: #{jarvis_forward.10} parent=0 // pred_fallthru
    _
  // Predicated region
  $region6: #{jarvis_forward.10} parent=0 // pred_check
    _
  $region7: #{jarvis_forward.10} parent=0 // pred_check_branch
    %13 = sbr.rel (0) target = $region9
  $region8: #{jarvis_forward.10} parent=0 // pred_region
    _
  $region9: #{jarvis_forward.10} parent=0 // pred_fallthru
    _
  // Predicated region
  $region10: #{jarvis_forward.10} parent=0 // pred_check
    _
  $region11: #{jarvis_forward.10} parent=0 // pred_check_branch
    %15 = sbr.rel (0) target = $region13
  $region12: #{jarvis_forward.10} parent=0 // pred_region
    _
  $region13: #{jarvis_forward.10} parent=0 // pred_fallthru
    _
  // Predicated region
  $region14: #{jarvis_forward.10} parent=0 // pred_check
    _
  $region15: #{jarvis_forward.10} parent=0 // pred_check_branch
    %17 = sbr.rel (0) target = $region17
  $region16: #{jarvis_forward.10} parent=0 // pred_region
    _
  $region17: #{jarvis_forward.10} parent=0 // pred_fallthru
    _
  // Predicated region
  $region18: #{jarvis_forward.10} parent=0 // pred_check
    _
  $region19: #{jarvis_forward.10} parent=0 // pred_check_branch
    %19 = sbr.rel (0) target = $region21
  $region20: #{jarvis_forward.10} parent=0 // pred_region
    _
  $region21: #{jarvis_forward.10} parent=0 // pred_fallthru
    _
  %v20 = vld [vmem:[%s0] sm:$0xff]
  %v21 = vld [vmem:[%s0 + $0x8] sm:$0xff]
  %vm22 = vcmask 523264
  %v23 = vsel %vm22, %v20, 0.0
  %24 = vadd.xlane.f32.xlu0 %v23
  %v25 = vpop.xlane.xlu0 %24
  %v26 = vsel %vm22, %v21, 0.0
  %27 = vadd.xlane.f32.xlu0 %v26
  %v28 = vpop.xlane.xlu0 %27
  %v29 = vrcp.pop 64.0
  %v30 = vmul.f32 64.0, %v29
  %v31 = vsub.f32 1.0, %v30
  %v32 = vmul.f32 %v29, %v31
  %v33 = vadd.f32 %v29, %v32
  %vm34 = vweird.f32 %v29
  %v35 = vsel %vm34, %v29, %v33
  %v36 = vmul.f32 %v25, %v35
  %v37 = vmul.f32 %v28, %v35
  %v38 = vsub.f32 %v20, %v36
  %v39 = vsub.f32 %v21, %v37
  %v40 = vmul.f32 %v38, %v38
  %v41 = vmul.f32 %v39, %v39
  %v42 = vsel %vm22, %v40, 0.0
  %43 = vadd.xlane.f32.xlu0 %v42
  %v44 = vpop.xlane.xlu0 %43
  %v45 = vsel %vm22, %v41, 0.0
  %46 = vadd.xlane.f32.xlu0 %v45
  %v47 = vpop.xlane.xlu0 %46
  %v48 = vmul.f32 %v44, %v35
  %v49 = vmul.f32 %v47, %v35
  %v50 = vadd.f32 %v48, 1e-05
  %v51 = vadd.f32 %v49, 1e-05
  %v52 = vrsqrt.pop %v50
  %v53 = vmul.f32 %v52, %v50
  %v54 = vmul.f32 %v53, %v52
  %v55 = vmul.f32 0.5, %v54
  %v56 = vsub.f32 1.5, %v55
  %v57 = vmul.f32 %v52, %v56
  %vm58 = vweird.f32 %v50
  %vm59 = vweird.f32 %v52
  %vm60 = vmor %vm58, %vm59
  %v61 = vsel %vm60, %v52, %v57
  %v62 = vrsqrt.pop %v51
  %v63 = vmul.f32 %v62, %v51
  %v64 = vmul.f32 %v63, %v62
  %v65 = vmul.f32 0.5, %v64
  %v66 = vsub.f32 1.5, %v65
  %v67 = vmul.f32 %v62, %v66
  %vm68 = vweird.f32 %v51
  %vm69 = vweird.f32 %v62
  %vm70 = vmor %vm68, %vm69
  %v71 = vsel %vm70, %v62, %v67
  %v72 = vmul.f32 %v38, %v61
  %v73 = vmul.f32 %v39, %v71
  %v74 = vld [vmem:[%s1] sm:$0x1]
  %v76 = vperm.slane %v74, 0
  %v78 = vmul.f32 %v72, %v76
  %v79 = vmul.f32 %v73, %v76
  %v80 = vld [vmem:[%s2] sm:$0x1]
  %v82 = vperm.slane %v80, 0
  %v84 = vadd.f32 %v78, %v82
  %v85 = vadd.f32 %v79, %v82
  %v86 = vpack.c.bf16 %v85, %v84
  %v87 = vld [vmem:[%s3] sm:$0xf]
  %v88 = vld [vmem:[%s3 + $0x4] sm:$0xf]
  %v89 = vld [vmem:[%s3 + $0x8] sm:$0xf]
  %v90 = vld [vmem:[%s3 + $0xc] sm:$0xf]
  %v91 = vld [vmem:[%s3 + $0x10] sm:$0xf]
  %v92 = vld [vmem:[%s3 + $0x14] sm:$0xf]
  %v93 = vld [vmem:[%s3 + $0x18] sm:$0xf]
  %v94 = vld [vmem:[%s3 + $0x1c] sm:$0xf]
  %v95 = vld [vmem:[%s3 + $0x20] sm:$0xf]
  %v96 = vld [vmem:[%s3 + $0x24] sm:$0xf]
  %v97 = vld [vmem:[%s3 + $0x28] sm:$0xf]
  %v98 = vld [vmem:[%s3 + $0x2c] sm:$0xf]
  %v99 = vld [vmem:[%s3 + $0x30] sm:$0xf]
  %v100 = vld [vmem:[%s3 + $0x34] sm:$0xf]
  %v101 = vld [vmem:[%s3 + $0x38] sm:$0xf]
  %v102 = vld [vmem:[%s3 + $0x3c] sm:$0xf]
  %v103 = vld [vmem:[%s4] sm:$0x1]
  %v105 = vperm.slane %v103, 0
  %v123 = vunpack.c.l.b16 %v87
  %v124 = vunpack.c.l.b16 %v88
  %v125 = vunpack.c.l.b16 %v89
  %v126 = vunpack.c.l.b16 %v90
  %v127 = vunpack.c.l.b16 %v91
  %v128 = vunpack.c.l.b16 %v92
  %v129 = vunpack.c.l.b16 %v93
  %v130 = vunpack.c.l.b16 %v94
  %v131 = vunpack.c.l.b16 %v95
  %v132 = vunpack.c.l.b16 %v96
  %v133 = vunpack.c.l.b16 %v97
  %v134 = vunpack.c.l.b16 %v98
  %v135 = vunpack.c.l.b16 %v99
  %v136 = vunpack.c.l.b16 %v100
  %v137 = vunpack.c.l.b16 %v101
  %v138 = vunpack.c.l.b16 %v102
  %v139 = vpack.c.b16 %v124, %v123
  %v140 = vpack.c.b16 %v126, %v125
  %v141 = vpack.c.b16 %v128, %v127
  %v142 = vpack.c.b16 %v130, %v129
  %v143 = vpack.c.b16 %v132, %v131
  %v144 = vpack.c.b16 %v134, %v133
  %v145 = vpack.c.b16 %v136, %v135
  %v146 = vpack.c.b16 %v138, %v137
  %v148 = vsel %vm22, %v86, 0
  %v151 = vsel %vm22, %v139, 0
  %v154 = vsel %vm22, %v140, 0
  %v157 = vsel %vm22, %v141, 0
  %v160 = vsel %vm22, %v142, 0
  %v163 = vsel %vm22, %v143, 0
  %v166 = vsel %vm22, %v144, 0
  %v169 = vsel %vm22, %v145, 0
  %v172 = vsel %vm22, %v146, 0
  %174 = vmatpush.bf16.xpose.msra.mxu0 %v172
  %175 = vmatpush.bf16.xpose.msra.mxu0 %v169
  %176 = vmatpush.bf16.xpose.msra.mxu0 %v166
  %177 = vmatpush.bf16.xpose.msra.mxu0 %v163
  %178 = vmatpush.bf16.xpose.msra.mxu0 %v160
  %179 = vmatpush.bf16.xpose.msra.mxu0 %v157
  %180 = vmatpush.bf16.xpose.msra.mxu0 %v154
  %181 = vmatpush.bf16.xpose.msra.mxu0 %v151
  %182 = vmatmul.bf16.gmra.mxu0 %v148
  %v183 = vpop.f32.mrf.mxu0
  %v184 = vadd.f32 %v105, %v183
  %v185 = vpop.f32.mrf.mxu0
  %v186 = vadd.f32 %v105, %v185
  %187 = vdwg.mxu0
  %188 = vst [vmem:[%s5] sm:$0xff] %v184
  %189 = vst [vmem:[%s5 + $0x8] sm:$0xff] %v186
  // Predicated region
  $region22: #{jarvis_forward.10} parent=0 // pred_check
    _
  $region23: #{jarvis_forward.10} parent=0 // pred_check_branch
    %191 = sbr.rel (0) target = $region25
  $region24: #{jarvis_forward.10} parent=0 // pred_region
    _
  $region25: #{jarvis_forward.10} parent=0 // pred_fallthru
    _
  // Predicated region
  $region26: #{jarvis_forward.10} parent=0 // pred_check
    _
  $region27: #{jarvis_forward.10} parent=0 // pred_check_branch
    %193 = sbr.rel (0) target = $region29
  $region28: #{jarvis_forward.10} parent=0 // pred_region
    _
  $region29: #{jarvis_forward.10} parent=0 // pred_fallthru
    _

// kernel: jarvis_forward.12
$region0: #{jarvis_forward.12}
  #allocation0 [shape = 'u32[]', space=smem, size = 0x4, offset = 0x4, fixed_abs, tag = 'smem constant byte address 0x4 - core index']
  #allocation1 [shape = 'u32[72,128]{1,0:T(1,128)}', space=vmem, size = 0x9000, scoped, tag = 'internal scratch']
  #allocation2 [shape = 'f32[16,64]{1,0:T(8,128)}', space=vmem, size = 0x2000, scoped, tag = 'scratch operand']
  %s0 = inlined_call_operand.vmem [shape: bf16[16,64], index: 0, kind: input, shape index: {}]
  %s1 = inlined_call_operand.vmem [shape: bf16[64,64], index: 1, kind: input, shape index: {}]
  %s2 = inlined_call_operand.vmem [shape: f32[1,64], index: 2, kind: input, shape index: {}]
  %s3 = inlined_call_operand.vmem [shape: f32[16,64], index: 3, kind: input, shape index: {}]
  %s4 = inlined_call_operand.vmem [shape: f32[16,64], index: 4, kind: output, shape index: {}]
  %s5 = sld [smem:[#allocation0]]
  $region34: #{jarvis_forward.12} parent=0
    _
  %s7 = ssub.s32 1, %s5
  %s8 = scalar_select 0, %s7, %s5
  // Predicated region
  $region2: #{jarvis_forward.12} parent=0 // pred_check
    _
  $region3: #{jarvis_forward.12} parent=0 // pred_check_branch
    %10 = sbr.rel (0) target = $region5
  $region4: #{jarvis_forward.12} parent=0 // pred_region
    _
  $region5: #{jarvis_forward.12} parent=0 // pred_fallthru
    _
  // Predicated region
  $region6: #{jarvis_forward.12} parent=0 // pred_check
    _
  $region7: #{jarvis_forward.12} parent=0 // pred_check_branch
    %12 = sbr.rel (0) target = $region9
  $region8: #{jarvis_forward.12} parent=0 // pred_region
    _
  $region9: #{jarvis_forward.12} parent=0 // pred_fallthru
    _
  // Predicated region
  $region10: #{jarvis_forward.12} parent=0 // pred_check
    _
  $region11: #{jarvis_forward.12} parent=0 // pred_check_branch
    %14 = sbr.rel (0) target = $region13
  $region12: #{jarvis_forward.12} parent=0 // pred_region
    _
  $region13: #{jarvis_forward.12} parent=0 // pred_fallthru
    _
  // Predicated region
  $region14: #{jarvis_forward.12} parent=0 // pred_check
    _
  $region15: #{jarvis_forward.12} parent=0 // pred_check_branch
    %16 = sbr.rel (0) target = $region17
  $region16: #{jarvis_forward.12} parent=0 // pred_region
    _
  $region17: #{jarvis_forward.12} parent=0 // pred_fallthru
    _
  %p18 = scmp.eq.s32.totalorder 0, 0
  // Predicated region
  $region18: #{jarvis_forward.12} parent=0 // pred_check
    %p19 = pneg %p18
  $region19: #{jarvis_forward.12} parent=0 // pred_check_branch
    %21 = sbr.rel (%p19) target = $region21
  $region20: #{jarvis_forward.12} parent=0 // pred_region
    %vm22 = vcmask 523264
    %23 = vst.msk [vmem:[#allocation2] sm:$0xff] %vm22, 0.0
    %24 = vst.msk [vmem:[#allocation2 + $0x8] sm:$0xff] %vm22, 0.0
  $region21: #{jarvis_forward.12} parent=0 // pred_fallthru
    _
  %v25 = vld [vmem:[#allocation2] sm:$0xff]
  %v26 = vld [vmem:[#allocation2 + $0x8] sm:$0xff]
  %v27 = vld [vmem:[%s0] sm:$0xf]
  %v28 = vld [vmem:[%s0 + $0x4] sm:$0xf]
  %v29 = vld [vmem:[%s1] sm:$0xf]
  %v30 = vld [vmem:[%s1 + $0x4] sm:$0xf]
  %v31 = vld [vmem:[%s1 + $0x8] sm:$0xf]
  %v32 = vld [vmem:[%s1 + $0xc] sm:$0xf]
  %v33 = vld [vmem:[%s1 + $0x10] sm:$0xf]
  %v34 = vld [vmem:[%s1 + $0x14] sm:$0xf]
  %v35 = vld [vmem:[%s1 + $0x18] sm:$0xf]
  %v36 = vld [vmem:[%s1 + $0x1c] sm:$0xf]
  %v39 = vunpack.c.l.b16 %v27
  %v40 = vunpack.c.l.b16 %v28
  %v41 = vpack.c.b16 %v40, %v39
  %v50 = vunpack.c.l.b16 %v29
  %v51 = vunpack.c.l.b16 %v30
  %v52 = vunpack.c.l.b16 %v31
  %v53 = vunpack.c.l.b16 %v32
  %v54 = vunpack.c.l.b16 %v33
  %v55 = vunpack.c.l.b16 %v34
  %v56 = vunpack.c.l.b16 %v35
  %v57 = vunpack.c.l.b16 %v36
  %v58 = vpack.c.b16 %v51, %v50
  %v59 = vpack.c.b16 %v53, %v52
  %v60 = vpack.c.b16 %v55, %v54
  %v61 = vpack.c.b16 %v57, %v56
  %vm62 = vcmask 523264
  %v64 = vsel %vm62, %v41, 0
  %v67 = vsel %vm62, %v58, 0
  %v70 = vsel %vm62, %v59, 0
  %v73 = vsel %vm62, %v60, 0
  %v76 = vsel %vm62, %v61, 0
  %78 = vmatpush.bf16.xpose.msra.mxu0 0
  %79 = vmatpush.bf16.xpose.msra.mxu0 0
  %80 = vmatpush.bf16.xpose.msra.mxu0 0
  %81 = vmatpush.bf16.xpose.msra.mxu0 0
  %82 = vmatpush.bf16.xpose.msra.mxu0 %v76
  %83 = vmatpush.bf16.xpose.msra.mxu0 %v73
  %84 = vmatpush.bf16.xpose.msra.mxu0 %v70
  %85 = vmatpush.bf16.xpose.msra.mxu0 %v67
  %86 = vmatmul.bf16.gmra.mxu0 %v64
  %v87 = vpop.f32.mrf.mxu0
  %v88 = vadd.f32 0.0, %v87
  %v89 = vpop.f32.mrf.mxu0
  %v90 = vadd.f32 0.0, %v89
  %91 = vdwg.mxu0
  %v92 = vadd.f32 %v25, %v88
  %v93 = vadd.f32 %v26, %v90
  %94 = vst.msk [vmem:[#allocation2] sm:$0xff] %vm62, %v92
  %95 = vst.msk [vmem:[#allocation2 + $0x8] sm:$0xff] %vm62, %v93
  // Predicated region
  $region22: #{jarvis_forward.12} parent=0 // pred_check
    %p96 = pneg %p18
  $region23: #{jarvis_forward.12} parent=0 // pred_check_branch
    %98 = sbr.rel (%p96) target = $region25
  $region24: #{jarvis_forward.12} parent=0 // pred_region
    %v99 = vld [vmem:[#allocation2] sm:$0xff]
    %v100 = vld [vmem:[#allocation2 + $0x8] sm:$0xff]
    %v101 = vld [vmem:[%s2] sm:$0x1]
    %v103 = vperm.slane %v101, 0
    %v105 = vadd.f32 %v99, %v103
    %v106 = vadd.f32 %v100, %v103
    %v107 = vld [vmem:[%s3] sm:$0xff]
    %v108 = vld [vmem:[%s3 + $0x8] sm:$0xff]
    %v109 = vadd.f32 %v105, %v107
    %v110 = vadd.f32 %v106, %v108
    %111 = vst.msk [vmem:[%s4] sm:$0xff] %vm62, %v109
    %112 = vst.msk [vmem:[%s4 + $0x8] sm:$0xff] %vm62, %v110
  $region25: #{jarvis_forward.12} parent=0 // pred_fallthru
    _
  // Predicated region
  $region26: #{jarvis_forward.12} parent=0 // pred_check
    _
  $region27: #{jarvis_forward.12} parent=0 // pred_check_branch
    %114 = sbr.rel (0) target = $region29
  $region28: #{jarvis_forward.12} parent=0 // pred_region
    _
  $region29: #{jarvis_forward.12} parent=0 // pred_fallthru
    _
  // Predicated region
  $region30: #{jarvis_forward.12} parent=0 // pred_check
    _
  $region31: #{jarvis_forward.12} parent=0 // pred_check_branch
    %116 = sbr.rel (0) target = $region33
  $region32: #{jarvis_forward.12} parent=0 // pred_region
    _
  $region33: #{jarvis_forward.12} parent=0 // pred_fallthru
    _

// kernel: jarvis_forward.18
$region0: #{jarvis_forward.18}
  #allocation0 [shape = 'u32[]', space=smem, size = 0x4, offset = 0x4, fixed_abs, tag = 'smem constant byte address 0x4 - core index']
  #allocation1 [shape = 'u32[72,128]{1,0:T(1,128)}', space=vmem, size = 0x9000, scoped, tag = 'internal scratch']
  %s0 = inlined_call_operand.vmem [shape: f32[16,64], index: 0, kind: input, shape index: {}]
  %s1 = inlined_call_operand.vmem [shape: f32[1,64], index: 1, kind: input, shape index: {}]
  %s2 = inlined_call_operand.vmem [shape: f32[1,64], index: 2, kind: input, shape index: {}]
  %s3 = inlined_call_operand.vmem [shape: f32[16,64], index: 3, kind: output, shape index: {}]
  %s4 = sld [smem:[#allocation0]]
  $region22: #{jarvis_forward.18} parent=0
    _
  %s6 = ssub.s32 1, %s4
  %s7 = scalar_select 0, %s6, %s4
  // Predicated region
  $region2: #{jarvis_forward.18} parent=0 // pred_check
    _
  $region3: #{jarvis_forward.18} parent=0 // pred_check_branch
    %9 = sbr.rel (0) target = $region5
  $region4: #{jarvis_forward.18} parent=0 // pred_region
    _
  $region5: #{jarvis_forward.18} parent=0 // pred_fallthru
    _
  // Predicated region
  $region6: #{jarvis_forward.18} parent=0 // pred_check
    _
  $region7: #{jarvis_forward.18} parent=0 // pred_check_branch
    %11 = sbr.rel (0) target = $region9
  $region8: #{jarvis_forward.18} parent=0 // pred_region
    _
  $region9: #{jarvis_forward.18} parent=0 // pred_fallthru
    _
  // Predicated region
  $region10: #{jarvis_forward.18} parent=0 // pred_check
    _
  $region11: #{jarvis_forward.18} parent=0 // pred_check_branch
    %13 = sbr.rel (0) target = $region13
  $region12: #{jarvis_forward.18} parent=0 // pred_region
    _
  $region13: #{jarvis_forward.18} parent=0 // pred_fallthru
    _
  %v14 = vld [vmem:[%s0] sm:$0xff]
  %v15 = vld [vmem:[%s0 + $0x8] sm:$0xff]
  %vm16 = vcmask 523264
  %v17 = vsel %vm16, %v14, 0.0
  %18 = vadd.xlane.f32.xlu0 %v17
  %v19 = vpop.xlane.xlu0 %18
  %v20 = vsel %vm16, %v15, 0.0
  %21 = vadd.xlane.f32.xlu0 %v20
  %v22 = vpop.xlane.xlu0 %21
  %v23 = vrcp.pop 64.0
  %v24 = vmul.f32 64.0, %v23
  %v25 = vsub.f32 1.0, %v24
  %v26 = vmul.f32 %v23, %v25
  %v27 = vadd.f32 %v23, %v26
  %vm28 = vweird.f32 %v23
  %v29 = vsel %vm28, %v23, %v27
  %v30 = vmul.f32 %v19, %v29
  %v31 = vmul.f32 %v22, %v29
  %v32 = vsub.f32 %v14, %v30
  %v33 = vsub.f32 %v15, %v31
  %v34 = vmul.f32 %v32, %v32
  %v35 = vmul.f32 %v33, %v33
  %v36 = vsel %vm16, %v34, 0.0
  %37 = vadd.xlane.f32.xlu0 %v36
  %v38 = vpop.xlane.xlu0 %37
  %v39 = vsel %vm16, %v35, 0.0
  %40 = vadd.xlane.f32.xlu0 %v39
  %v41 = vpop.xlane.xlu0 %40
  %v42 = vmul.f32 %v38, %v29
  %v43 = vmul.f32 %v41, %v29
  %v44 = vadd.f32 %v42, 1e-05
  %v45 = vadd.f32 %v43, 1e-05
  %v46 = vrsqrt.pop %v44
  %v47 = vmul.f32 %v46, %v44
  %v48 = vmul.f32 %v47, %v46
  %v49 = vmul.f32 0.5, %v48
  %v50 = vsub.f32 1.5, %v49
  %v51 = vmul.f32 %v46, %v50
  %vm52 = vweird.f32 %v44
  %vm53 = vweird.f32 %v46
  %vm54 = vmor %vm52, %vm53
  %v55 = vsel %vm54, %v46, %v51
  %v56 = vrsqrt.pop %v45
  %v57 = vmul.f32 %v56, %v45
  %v58 = vmul.f32 %v57, %v56
  %v59 = vmul.f32 0.5, %v58
  %v60 = vsub.f32 1.5, %v59
  %v61 = vmul.f32 %v56, %v60
  %vm62 = vweird.f32 %v45
  %vm63 = vweird.f32 %v56
  %vm64 = vmor %vm62, %vm63
  %v65 = vsel %vm64, %v56, %v61
  %v66 = vmul.f32 %v32, %v55
  %v67 = vmul.f32 %v33, %v65
  %v68 = vld [vmem:[%s1] sm:$0x1]
  %v70 = vperm.slane %v68, 0
  %v72 = vmul.f32 %v66, %v70
  %v73 = vmul.f32 %v67, %v70
  %v74 = vld [vmem:[%s2] sm:$0x1]
  %v76 = vperm.slane %v74, 0
  %v78 = vadd.f32 %v72, %v76
  %v79 = vadd.f32 %v73, %v76
  %80 = vst.msk [vmem:[%s3] sm:$0xff] %vm16, %v78
  %81 = vst.msk [vmem:[%s3 + $0x8] sm:$0xff] %vm16, %v79
  // Predicated region
  $region14: #{jarvis_forward.18} parent=0 // pred_check
    _
  $region15: #{jarvis_forward.18} parent=0 // pred_check_branch
    %83 = sbr.rel (0) target = $region17
  $region16: #{jarvis_forward.18} parent=0 // pred_region
    _
  $region17: #{jarvis_forward.18} parent=0 // pred_fallthru
    _
  // Predicated region
  $region18: #{jarvis_forward.18} parent=0 // pred_check
    _
  $region19: #{jarvis_forward.18} parent=0 // pred_check_branch
    %85 = sbr.rel (0) target = $region21
  $region20: #{jarvis_forward.18} parent=0 // pred_region
    _
  $region21: #{jarvis_forward.18} parent=0 // pred_fallthru
    _

// kernel: jarvis_forward.13
$region0: #{jarvis_forward.13}
  #allocation0 [shape = 'u32[]', space=smem, size = 0x4, offset = 0x4, fixed_abs, tag = 'smem constant byte address 0x4 - core index']
  #allocation1 [shape = 'u32[72,128]{1,0:T(1,128)}', space=vmem, size = 0x9000, scoped, tag = 'internal scratch']
  #allocation2 [shape = 'f32[16,64]{1,0:T(8,128)}', space=vmem, size = 0x2000, scoped, tag = 'scratch operand']
  %s0 = inlined_call_operand.vmem [shape: f32[16,64], index: 0, kind: input, shape index: {}]
  %s1 = inlined_call_operand.vmem [shape: f32[1,64], index: 1, kind: input, shape index: {}]
  %s2 = inlined_call_operand.vmem [shape: f32[1,64], index: 2, kind: input, shape index: {}]
  %s3 = inlined_call_operand.vmem [shape: bf16[256,64], index: 3, kind: input, shape index: {}]
  %s4 = inlined_call_operand.vmem [shape: bf16[256,64], index: 4, kind: input, shape index: {}]
  %s5 = inlined_call_operand.vmem [shape: bf16[64,256], index: 5, kind: input, shape index: {}]
  %s6 = inlined_call_operand.vmem [shape: f32[16,64], index: 6, kind: output, shape index: {}]
  %s7 = sld [smem:[#allocation0]]
  $region42: #{jarvis_forward.13} parent=0
    _
  %s9 = ssub.s32 1, %s7
  %s10 = scalar_select 0, %s9, %s7
  // Predicated region
  $region2: #{jarvis_forward.13} parent=0 // pred_check
    _
  $region3: #{jarvis_forward.13} parent=0 // pred_check_branch
    %12 = sbr.rel (0) target = $region5
  $region4: #{jarvis_forward.13} parent=0 // pred_region
    _
  $region5: #{jarvis_forward.13} parent=0 // pred_fallthru
    _
  // Predicated region
  $region6: #{jarvis_forward.13} parent=0 // pred_check
    _
  $region7: #{jarvis_forward.13} parent=0 // pred_check_branch
    %14 = sbr.rel (0) target = $region9
  $region8: #{jarvis_forward.13} parent=0 // pred_region
    _
  $region9: #{jarvis_forward.13} parent=0 // pred_fallthru
    _
  // Predicated region
  $region10: #{jarvis_forward.13} parent=0 // pred_check
    _
  $region11: #{jarvis_forward.13} parent=0 // pred_check_branch
    %16 = sbr.rel (0) target = $region13
  $region12: #{jarvis_forward.13} parent=0 // pred_region
    _
  $region13: #{jarvis_forward.13} parent=0 // pred_fallthru
    _
  // Predicated region
  $region14: #{jarvis_forward.13} parent=0 // pred_check
    _
  $region15: #{jarvis_forward.13} parent=0 // pred_check_branch
    %18 = sbr.rel (0) target = $region17
  $region16: #{jarvis_forward.13} parent=0 // pred_region
    _
  $region17: #{jarvis_forward.13} parent=0 // pred_fallthru
    _
  // Predicated region
  $region18: #{jarvis_forward.13} parent=0 // pred_check
    _
  $region19: #{jarvis_forward.13} parent=0 // pred_check_branch
    %20 = sbr.rel (0) target = $region21
  $region20: #{jarvis_forward.13} parent=0 // pred_region
    _
  $region21: #{jarvis_forward.13} parent=0 // pred_fallthru
    _
  // Predicated region
  $region22: #{jarvis_forward.13} parent=0 // pred_check
    _
  $region23: #{jarvis_forward.13} parent=0 // pred_check_branch
    %22 = sbr.rel (0) target = $region25
  $region24: #{jarvis_forward.13} parent=0 // pred_region
    _
  $region25: #{jarvis_forward.13} parent=0 // pred_fallthru
    _
  %v24 = vld [vmem:[%s0] sm:$0xff]
  %v25 = vld [vmem:[%s0 + $0x8] sm:$0xff]
  %vm26 = vcmask 523264
  %v27 = vsel %vm26, %v24, 0.0
  %28 = vadd.xlane.f32.xlu0 %v27
  %v29 = vpop.xlane.xlu0 %28
  %v30 = vsel %vm26, %v25, 0.0
  %31 = vadd.xlane.f32.xlu0 %v30
  %v32 = vpop.xlane.xlu0 %31
  %v33 = vrcp.pop 64.0
  %v34 = vmul.f32 64.0, %v33
  %v35 = vsub.f32 1.0, %v34
  %v36 = vmul.f32 %v33, %v35
  %v37 = vadd.f32 %v33, %v36
  %vm38 = vweird.f32 %v33
  %v39 = vsel %vm38, %v33, %v37
  %v40 = vmul.f32 %v29, %v39
  %v41 = vmul.f32 %v32, %v39
  %v42 = vsub.f32 %v24, %v40
  %v43 = vsub.f32 %v25, %v41
  %v44 = vmul.f32 %v42, %v42
  %v45 = vmul.f32 %v43, %v43
  %v46 = vsel %vm26, %v44, 0.0
  %47 = vadd.xlane.f32.xlu0 %v46
  %v48 = vpop.xlane.xlu0 %47
  %v49 = vsel %vm26, %v45, 0.0
  %50 = vadd.xlane.f32.xlu0 %v49
  %v51 = vpop.xlane.xlu0 %50
  %v52 = vmul.f32 %v48, %v39
  %v53 = vmul.f32 %v51, %v39
  %v54 = vadd.f32 %v52, 1e-05
  %v55 = vadd.f32 %v53, 1e-05
  %v56 = vrsqrt.pop %v54
  %v57 = vmul.f32 %v56, %v54
  %v58 = vmul.f32 %v57, %v56
  %v59 = vmul.f32 0.5, %v58
  %v60 = vsub.f32 1.5, %v59
  %v61 = vmul.f32 %v56, %v60
  %vm62 = vweird.f32 %v54
  %vm63 = vweird.f32 %v56
  %vm64 = vmor %vm62, %vm63
  %v65 = vsel %vm64, %v56, %v61
  %v66 = vrsqrt.pop %v55
  %v67 = vmul.f32 %v66, %v55
  %v68 = vmul.f32 %v67, %v66
  %v69 = vmul.f32 0.5, %v68
  %v70 = vsub.f32 1.5, %v69
  %v71 = vmul.f32 %v66, %v70
  %vm72 = vweird.f32 %v55
  %vm73 = vweird.f32 %v66
  %vm74 = vmor %vm72, %vm73
  %v75 = vsel %vm74, %v66, %v71
  %v76 = vmul.f32 %v42, %v65
  %v77 = vmul.f32 %v43, %v75
  %v78 = vld [vmem:[%s1] sm:$0x1]
  %v80 = vperm.slane %v78, 0
  %v82 = vmul.f32 %v76, %v80
  %v83 = vmul.f32 %v77, %v80
  %v84 = vld [vmem:[%s2] sm:$0x1]
  %v86 = vperm.slane %v84, 0
  %v88 = vadd.f32 %v82, %v86
  %v89 = vadd.f32 %v83, %v86
  %v90 = vpack.c.bf16 %v89, %v88
  %v91 = vld [vmem:[%s3] sm:$0xf]
  %v92 = vld [vmem:[%s3 + $0x4] sm:$0xf]
  %v93 = vld [vmem:[%s3 + $0x8] sm:$0xf]
  %v94 = vld [vmem:[%s3 + $0xc] sm:$0xf]
  %v95 = vld [vmem:[%s3 + $0x10] sm:$0xf]
  %v96 = vld [vmem:[%s3 + $0x14] sm:$0xf]
  %v97 = vld [vmem:[%s3 + $0x18] sm:$0xf]
  %v98 = vld [vmem:[%s3 + $0x1c] sm:$0xf]
  %v99 = vld [vmem:[%s3 + $0x20] sm:$0xf]
  %v100 = vld [vmem:[%s3 + $0x24] sm:$0xf]
  %v101 = vld [vmem:[%s3 + $0x28] sm:$0xf]
  %v102 = vld [vmem:[%s3 + $0x2c] sm:$0xf]
  %v103 = vld [vmem:[%s3 + $0x30] sm:$0xf]
  %v104 = vld [vmem:[%s3 + $0x34] sm:$0xf]
  %v105 = vld [vmem:[%s3 + $0x38] sm:$0xf]
  %v106 = vld [vmem:[%s3 + $0x3c] sm:$0xf]
  %v107 = vld [vmem:[%s3 + $0x40] sm:$0xf]
  %v108 = vld [vmem:[%s3 + $0x44] sm:$0xf]
  %v109 = vld [vmem:[%s3 + $0x48] sm:$0xf]
  %v110 = vld [vmem:[%s3 + $0x4c] sm:$0xf]
  %v111 = vld [vmem:[%s3 + $0x50] sm:$0xf]
  %v112 = vld [vmem:[%s3 + $0x54] sm:$0xf]
  %v113 = vld [vmem:[%s3 + $0x58] sm:$0xf]
  %v114 = vld [vmem:[%s3 + $0x5c] sm:$0xf]
  %v115 = vld [vmem:[%s3 + $0x60] sm:$0xf]
  %v116 = vld [vmem:[%s3 + $0x64] sm:$0xf]
  %v117 = vld [vmem:[%s3 + $0x68] sm:$0xf]
  %v118 = vld [vmem:[%s3 + $0x6c] sm:$0xf]
  %v119 = vld [vmem:[%s3 + $0x70] sm:$0xf]
  %v120 = vld [vmem:[%s3 + $0x74] sm:$0xf]
  %v121 = vld [vmem:[%s3 + $0x78] sm:$0xf]
  %v122 = vld [vmem:[%s3 + $0x7c] sm:$0xf]
  %v155 = vunpack.c.l.b16 %v91
  %v156 = vunpack.c.l.b16 %v92
  %v157 = vunpack.c.l.b16 %v93
  %v158 = vunpack.c.l.b16 %v94
  %v159 = vunpack.c.l.b16 %v95
  %v160 = vunpack.c.l.b16 %v96
  %v161 = vunpack.c.l.b16 %v97
  %v162 = vunpack.c.l.b16 %v98
  %v163 = vunpack.c.l.b16 %v99
  %v164 = vunpack.c.l.b16 %v100
  %v165 = vunpack.c.l.b16 %v101
  %v166 = vunpack.c.l.b16 %v102
  %v167 = vunpack.c.l.b16 %v103
  %v168 = vunpack.c.l.b16 %v104
  %v169 = vunpack.c.l.b16 %v105
  %v170 = vunpack.c.l.b16 %v106
  %v171 = vunpack.c.l.b16 %v107
  %v172 = vunpack.c.l.b16 %v108
  %v173 = vunpack.c.l.b16 %v109
  %v174 = vunpack.c.l.b16 %v110
  %v175 = vunpack.c.l.b16 %v111
  %v176 = vunpack.c.l.b16 %v112
  %v177 = vunpack.c.l.b16 %v113
  %v178 = vunpack.c.l.b16 %v114
  %v179 = vunpack.c.l.b16 %v115
  %v180 = vunpack.c.l.b16 %v116
  %v181 = vunpack.c.l.b16 %v117
  %v182 = vunpack.c.l.b16 %v118
  %v183 = vunpack.c.l.b16 %v119
  %v184 = vunpack.c.l.b16 %v120
  %v185 = vunpack.c.l.b16 %v121
  %v186 = vunpack.c.l.b16 %v122
  %v187 = vpack.c.b16 %v156, %v155
  %v188 = vpack.c.b16 %v158, %v157
  %v189 = vpack.c.b16 %v160, %v159
  %v190 = vpack.c.b16 %v162, %v161
  %v191 = vpack.c.b16 %v164, %v163
  %v192 = vpack.c.b16 %v166, %v165
  %v193 = vpack.c.b16 %v168, %v167
  %v194 = vpack.c.b16 %v170, %v169
  %v195 = vpack.c.b16 %v172, %v171
  %v196 = vpack.c.b16 %v174, %v173
  %v197 = vpack.c.b16 %v176, %v175
  %v198 = vpack.c.b16 %v178, %v177
  %v199 = vpack.c.b16 %v180, %v179
  %v200 = vpack.c.b16 %v182, %v181
  %v201 = vpack.c.b16 %v184, %v183
  %v202 = vpack.c.b16 %v186, %v185
  %v204 = vsel %vm26, %v90, 0
  %v207 = vsel %vm26, %v187, 0
  %v210 = vsel %vm26, %v188, 0
  %v213 = vsel %vm26, %v189, 0
  %v216 = vsel %vm26, %v190, 0
  %v219 = vsel %vm26, %v191, 0
  %v222 = vsel %vm26, %v192, 0
  %v225 = vsel %vm26, %v193, 0
  %v228 = vsel %vm26, %v194, 0
  %v231 = vsel %vm26, %v195, 0
  %v234 = vsel %vm26, %v196, 0
  %v237 = vsel %vm26, %v197, 0
  %v240 = vsel %vm26, %v198, 0
  %v243 = vsel %vm26, %v199, 0
  %v246 = vsel %vm26, %v200, 0
  %v249 = vsel %vm26, %v201, 0
  %v252 = vsel %vm26, %v202, 0
  %254 = vmatpush.bf16.xpose.msra.mxu0 %v228
  %255 = vmatpush.bf16.xpose.msra.mxu0 %v225
  %256 = vmatpush.bf16.xpose.msra.mxu0 %v222
  %257 = vmatpush.bf16.xpose.msra.mxu0 %v219
  %258 = vmatpush.bf16.xpose.msra.mxu0 %v216
  %259 = vmatpush.bf16.xpose.msra.mxu0 %v213
  %260 = vmatpush.bf16.xpose.msra.mxu0 %v210
  %261 = vmatpush.bf16.xpose.msra.mxu0 %v207
  %262 = vmatmul.bf16.gmra.mxu0 %v204
  %v263 = vpop.f32.mrf.mxu0
  %v264 = vadd.f32 0.0, %v263
  %v265 = vpop.f32.mrf.mxu0
  %v266 = vadd.f32 0.0, %v265
  %267 = vdwg.mxu0
  %268 = vmatpush.bf16.xpose.msra.mxu0 %v252
  %269 = vmatpush.bf16.xpose.msra.mxu0 %v249
  %270 = vmatpush.bf16.xpose.msra.mxu0 %v246
  %271 = vmatpush.bf16.xpose.msra.mxu0 %v243
  %272 = vmatpush.bf16.xpose.msra.mxu0 %v240
  %273 = vmatpush.bf16.xpose.msra.mxu0 %v237
  %274 = vmatpush.bf16.xpose.msra.mxu0 %v234
  %275 = vmatpush.bf16.xpose.msra.mxu0 %v231
  %276 = vmatmul.bf16.gmra.mxu0 %v204
  %v277 = vpop.f32.mrf.mxu0
  %v278 = vadd.f32 0.0, %v277
  %v279 = vpop.f32.mrf.mxu0
  %v280 = vadd.f32 0.0, %v279
  %281 = vdwg.mxu0
  %v282 = vld [vmem:[%s4] sm:$0xf]
  %v283 = vld [vmem:[%s4 + $0x4] sm:$0xf]
  %v284 = vld [vmem:[%s4 + $0x8] sm:$0xf]
  %v285 = vld [vmem:[%s4 + $0xc] sm:$0xf]
  %v286 = vld [vmem:[%s4 + $0x10] sm:$0xf]
  %v287 = vld [vmem:[%s4 + $0x14] sm:$0xf]
  %v288 = vld [vmem:[%s4 + $0x18] sm:$0xf]
  %v289 = vld [vmem:[%s4 + $0x1c] sm:$0xf]
  %v290 = vld [vmem:[%s4 + $0x20] sm:$0xf]
  %v291 = vld [vmem:[%s4 + $0x24] sm:$0xf]
  %v292 = vld [vmem:[%s4 + $0x28] sm:$0xf]
  %v293 = vld [vmem:[%s4 + $0x2c] sm:$0xf]
  %v294 = vld [vmem:[%s4 + $0x30] sm:$0xf]
  %v295 = vld [vmem:[%s4 + $0x34] sm:$0xf]
  %v296 = vld [vmem:[%s4 + $0x38] sm:$0xf]
  %v297 = vld [vmem:[%s4 + $0x3c] sm:$0xf]
  %v298 = vld [vmem:[%s4 + $0x40] sm:$0xf]
  %v299 = vld [vmem:[%s4 + $0x44] sm:$0xf]
  %v300 = vld [vmem:[%s4 + $0x48] sm:$0xf]
  %v301 = vld [vmem:[%s4 + $0x4c] sm:$0xf]
  %v302 = vld [vmem:[%s4 + $0x50] sm:$0xf]
  %v303 = vld [vmem:[%s4 + $0x54] sm:$0xf]
  %v304 = vld [vmem:[%s4 + $0x58] sm:$0xf]
  %v305 = vld [vmem:[%s4 + $0x5c] sm:$0xf]
  %v306 = vld [vmem:[%s4 + $0x60] sm:$0xf]
  %v307 = vld [vmem:[%s4 + $0x64] sm:$0xf]
  %v308 = vld [vmem:[%s4 + $0x68] sm:$0xf]
  %v309 = vld [vmem:[%s4 + $0x6c] sm:$0xf]
  %v310 = vld [vmem:[%s4 + $0x70] sm:$0xf]
  %v311 = vld [vmem:[%s4 + $0x74] sm:$0xf]
  %v312 = vld [vmem:[%s4 + $0x78] sm:$0xf]
  %v313 = vld [vmem:[%s4 + $0x7c] sm:$0xf]
  %v346 = vunpack.c.l.b16 %v282
  %v347 = vunpack.c.l.b16 %v283
  %v348 = vunpack.c.l.b16 %v284
  %v349 = vunpack.c.l.b16 %v285
  %v350 = vunpack.c.l.b16 %v286
  %v351 = vunpack.c.l.b16 %v287
  %v352 = vunpack.c.l.b16 %v288
  %v353 = vunpack.c.l.b16 %v289
  %v354 = vunpack.c.l.b16 %v290
  %v355 = vunpack.c.l.b16 %v291
  %v356 = vunpack.c.l.b16 %v292
  %v357 = vunpack.c.l.b16 %v293
  %v358 = vunpack.c.l.b16 %v294
  %v359 = vunpack.c.l.b16 %v295
  %v360 = vunpack.c.l.b16 %v296
  %v361 = vunpack.c.l.b16 %v297
  %v362 = vunpack.c.l.b16 %v298
  %v363 = vunpack.c.l.b16 %v299
  %v364 = vunpack.c.l.b16 %v300
  %v365 = vunpack.c.l.b16 %v301
  %v366 = vunpack.c.l.b16 %v302
  %v367 = vunpack.c.l.b16 %v303
  %v368 = vunpack.c.l.b16 %v304
  %v369 = vunpack.c.l.b16 %v305
  %v370 = vunpack.c.l.b16 %v306
  %v371 = vunpack.c.l.b16 %v307
  %v372 = vunpack.c.l.b16 %v308
  %v373 = vunpack.c.l.b16 %v309
  %v374 = vunpack.c.l.b16 %v310
  %v375 = vunpack.c.l.b16 %v311
  %v376 = vunpack.c.l.b16 %v312
  %v377 = vunpack.c.l.b16 %v313
  %v378 = vpack.c.b16 %v347, %v346
  %v379 = vpack.c.b16 %v349, %v348
  %v380 = vpack.c.b16 %v351, %v350
  %v381 = vpack.c.b16 %v353, %v352
  %v382 = vpack.c.b16 %v355, %v354
  %v383 = vpack.c.b16 %v357, %v356
  %v384 = vpack.c.b16 %v359, %v358
  %v385 = vpack.c.b16 %v361, %v360
  %v386 = vpack.c.b16 %v363, %v362
  %v387 = vpack.c.b16 %v365, %v364
  %v388 = vpack.c.b16 %v367, %v366
  %v389 = vpack.c.b16 %v369, %v368
  %v390 = vpack.c.b16 %v371, %v370
  %v391 = vpack.c.b16 %v373, %v372
  %v392 = vpack.c.b16 %v375, %v374
  %v393 = vpack.c.b16 %v377, %v376
  %v395 = vsel %vm26, %v378, 0
  %v398 = vsel %vm26, %v379, 0
  %v401 = vsel %vm26, %v380, 0
  %v404 = vsel %vm26, %v381, 0
  %v407 = vsel %vm26, %v382, 0
  %v410 = vsel %vm26, %v383, 0
  %v413 = vsel %vm26, %v384, 0
  %v416 = vsel %vm26, %v385, 0
  %v419 = vsel %vm26, %v386, 0
  %v422 = vsel %vm26, %v387, 0
  %v425 = vsel %vm26, %v388, 0
  %v428 = vsel %vm26, %v389, 0
  %v431 = vsel %vm26, %v390, 0
  %v434 = vsel %vm26, %v391, 0
  %v437 = vsel %vm26, %v392, 0
  %v440 = vsel %vm26, %v393, 0
  %442 = vmatpush.bf16.xpose.msra.mxu0 %v416
  %443 = vmatpush.bf16.xpose.msra.mxu0 %v413
  %444 = vmatpush.bf16.xpose.msra.mxu0 %v410
  %445 = vmatpush.bf16.xpose.msra.mxu0 %v407
  %446 = vmatpush.bf16.xpose.msra.mxu0 %v404
  %447 = vmatpush.bf16.xpose.msra.mxu0 %v401
  %448 = vmatpush.bf16.xpose.msra.mxu0 %v398
  %449 = vmatpush.bf16.xpose.msra.mxu0 %v395
  %450 = vmatmul.bf16.gmra.mxu0 %v204
  %v451 = vpop.f32.mrf.mxu0
  %v452 = vadd.f32 0.0, %v451
  %v453 = vpop.f32.mrf.mxu0
  %v454 = vadd.f32 0.0, %v453
  %455 = vdwg.mxu0
  %456 = vmatpush.bf16.xpose.msra.mxu0 %v440
  %457 = vmatpush.bf16.xpose.msra.mxu0 %v437
  %458 = vmatpush.bf16.xpose.msra.mxu0 %v434
  %459 = vmatpush.bf16.xpose.msra.mxu0 %v431
  %460 = vmatpush.bf16.xpose.msra.mxu0 %v428
  %461 = vmatpush.bf16.xpose.msra.mxu0 %v425
  %462 = vmatpush.bf16.xpose.msra.mxu0 %v422
  %463 = vmatpush.bf16.xpose.msra.mxu0 %v419
  %464 = vmatmul.bf16.gmra.mxu0 %v204
  %v465 = vpop.f32.mrf.mxu0
  %v466 = vadd.f32 0.0, %v465
  %v467 = vpop.f32.mrf.mxu0
  %v468 = vadd.f32 0.0, %v467
  %469 = vdwg.mxu0
  %v470 = vxor.u32 %v264, 2147483648
  %v471 = vxor.u32 %v278, 2147483648
  %v472 = vxor.u32 %v266, 2147483648
  %v473 = vxor.u32 %v280, 2147483648
  %v474 = vmul.f32 %v470, 1.442695
  %v475 = vpow.pop %v474
  %v476 = vmul.f32 %v471, 1.442695
  %v477 = vpow.pop %v476
  %v478 = vmul.f32 %v472, 1.442695
  %v479 = vpow.pop %v478
  %v480 = vmul.f32 %v473, 1.442695
  %v481 = vpow.pop %v480
  %v482 = vadd.f32 %v475, 1.0
  %v483 = vadd.f32 %v477, 1.0
  %v484 = vadd.f32 %v479, 1.0
  %v485 = vadd.f32 %v481, 1.0
  %v486 = vrcp.pop %v482
  %v487 = vmul.f32 %v482, %v486
  %v488 = vsub.f32 1.0, %v487
  %v489 = vmul.f32 %v486, %v488
  %v490 = vadd.f32 %v486, %v489
  %vm491 = vweird.f32 %v482
  %vm492 = vweird.f32 %v486
  %vm493 = vmor %vm491, %vm492
  %v494 = vsel %vm493, %v486, %v490
  %v495 = vand.u32 2147483647, %v482
  %vm496 = vcmp.eq.f32.partialorder %v495, 8.507059e+37
  %v497 = vand.u32 %v482, 2147483648
  %v498 = vor.u32 1.1754944e-38, %v497
  %v499 = vsel %vm496, %v498, %v494
  %v500 = vmul.f32 1.0, %v499
  %v501 = vrcp.pop %v483
  %v502 = vmul.f32 %v483, %v501
  %v503 = vsub.f32 1.0, %v502
  %v504 = vmul.f32 %v501, %v503
  %v505 = vadd.f32 %v501, %v504
  %vm506 = vweird.f32 %v483
  %vm507 = vweird.f32 %v501
  %vm508 = vmor %vm506, %vm507
  %v509 = vsel %vm508, %v501, %v505
  %v510 = vand.u32 2147483647, %v483
  %vm511 = vcmp.eq.f32.partialorder %v510, 8.507059e+37
  %v512 = vand.u32 %v483, 2147483648
  %v513 = vor.u32 1.1754944e-38, %v512
  %v514 = vsel %vm511, %v513, %v509
  %v515 = vmul.f32 1.0, %v514
  %v516 = vrcp.pop %v484
  %v517 = vmul.f32 %v484, %v516
  %v518 = vsub.f32 1.0, %v517
  %v519 = vmul.f32 %v516, %v518
  %v520 = vadd.f32 %v516, %v519
  %vm521 = vweird.f32 %v484
  %vm522 = vweird.f32 %v516
  %vm523 = vmor %vm521, %vm522
  %v524 = vsel %vm523, %v516, %v520
  %v525 = vand.u32 2147483647, %v484
  %vm526 = vcmp.eq.f32.partialorder %v525, 8.507059e+37
  %v527 = vand.u32 %v484, 2147483648
  %v528 = vor.u32 1.1754944e-38, %v527
  %v529 = vsel %vm526, %v528, %v524
  %v530 = vmul.f32 1.0, %v529
  %v531 = vrcp.pop %v485
  %v532 = vmul.f32 %v485, %v531
  %v533 = vsub.f32 1.0, %v532
  %v534 = vmul.f32 %v531, %v533
  %v535 = vadd.f32 %v531, %v534
  %vm536 = vweird.f32 %v485
  %vm537 = vweird.f32 %v531
  %vm538 = vmor %vm536, %vm537
  %v539 = vsel %vm538, %v531, %v535
  %v540 = vand.u32 2147483647, %v485
  %vm541 = vcmp.eq.f32.partialorder %v540, 8.507059e+37
  %v542 = vand.u32 %v485, 2147483648
  %v543 = vor.u32 1.1754944e-38, %v542
  %v544 = vsel %vm541, %v543, %v539
  %v545 = vmul.f32 1.0, %v544
  %v546 = vmul.f32 %v264, %v500
  %v547 = vmul.f32 %v278, %v515
  %v548 = vmul.f32 %v266, %v530
  %v549 = vmul.f32 %v280, %v545
  %v550 = vmul.f32 %v546, %v452
  %v551 = vmul.f32 %v547, %v466
  %v552 = vmul.f32 %v548, %v454
  %v553 = vmul.f32 %v549, %v468
  %v554 = vpack.c.bf16 %v552, %v550
  %v555 = vpack.c.bf16 %v553, %v551
  %p556 = scmp.eq.s32.totalorder 0, 0
  // Predicated region
  $region26: #{jarvis_forward.13} parent=0 // pred_check
    %p557 = pneg %p556
  $region27: #{jarvis_forward.13} parent=0 // pred_check_branch
    %559 = sbr.rel (%p557) target = $region29
  $region28: #{jarvis_forward.13} parent=0 // pred_region
    %560 = vst.msk [vmem:[#allocation2] sm:$0xff] %vm26, %v24
    %561 = vst.msk [vmem:[#allocation2 + $0x8] sm:$0xff] %vm26, %v25
  $region29: #{jarvis_forward.13} parent=0 // pred_fallthru
    _
  %v562 = vld [vmem:[#allocation2] sm:$0xff]
  %v563 = vld [vmem:[#allocation2 + $0x8] sm:$0xff]
  %v564 = vld [vmem:[%s5] sm:$0xff]
  %v565 = vld [vmem:[%s5 + $0x8] sm:$0xff]
  %v566 = vld [vmem:[%s5 + $0x10] sm:$0xff]
  %v567 = vld [vmem:[%s5 + $0x18] sm:$0xff]
  %v568 = vld [vmem:[%s5 + $0x20] sm:$0xff]
  %v569 = vld [vmem:[%s5 + $0x28] sm:$0xff]
  %v570 = vld [vmem:[%s5 + $0x30] sm:$0xff]
  %v571 = vld [vmem:[%s5 + $0x38] sm:$0xff]
  %v580 = vunpack.c.l.b16 %v564
  %v581 = vunpack.c.h.b16 %v564
  %v582 = vunpack.c.l.b16 %v565
  %v583 = vunpack.c.h.b16 %v565
  %v584 = vunpack.c.l.b16 %v566
  %v585 = vunpack.c.h.b16 %v566
  %v586 = vunpack.c.l.b16 %v567
  %v587 = vunpack.c.h.b16 %v567
  %v588 = vunpack.c.l.b16 %v568
  %v589 = vunpack.c.h.b16 %v568
  %v590 = vunpack.c.l.b16 %v569
  %v591 = vunpack.c.h.b16 %v569
  %v592 = vunpack.c.l.b16 %v570
  %v593 = vunpack.c.h.b16 %v570
  %v594 = vunpack.c.l.b16 %v571
  %v595 = vunpack.c.h.b16 %v571
  %v596 = vpack.c.b16 %v582, %v580
  %v597 = vpack.c.b16 %v583, %v581
  %v598 = vpack.c.b16 %v586, %v584
  %v599 = vpack.c.b16 %v587, %v585
  %v600 = vpack.c.b16 %v590, %v588
  %v601 = vpack.c.b16 %v591, %v589
  %v602 = vpack.c.b16 %v594, %v592
  %v603 = vpack.c.b16 %v595, %v593
  %612 = vmatpush.bf16.xpose.msra.mxu0 0
  %613 = vmatpush.bf16.xpose.msra.mxu0 0
  %614 = vmatpush.bf16.xpose.msra.mxu0 0
  %615 = vmatpush.bf16.xpose.msra.mxu0 0
  %616 = vmatpush.bf16.xpose.msra.mxu0 %v602
  %617 = vmatpush.bf16.xpose.msra.mxu0 %v600
  %618 = vmatpush.bf16.xpose.msra.mxu0 %v598
  %619 = vmatpush.bf16.xpose.msra.mxu0 %v596
  %620 = vmatmul.bf16.gmra.mxu0 %v554
  %v621 = vpop.f32.mrf.mxu0
  %v622 = vadd.f32 0.0, %v621
  %v623 = vpop.f32.mrf.mxu0
  %v624 = vadd.f32 0.0, %v623
  %625 = vdwg.mxu0
  %626 = vmatpush.bf16.xpose.msra.mxu0 0
  %627 = vmatpush.bf16.xpose.msra.mxu0 0
  %628 = vmatpush.bf16.xpose.msra.mxu0 0
  %629 = vmatpush.bf16.xpose.msra.mxu0 0
  %630 = vmatpush.bf16.xpose.msra.mxu0 %v603
  %631 = vmatpush.bf16.xpose.msra.mxu0 %v601
  %632 = vmatpush.bf16.xpose.msra.mxu0 %v599
  %633 = vmatpush.bf16.xpose.msra.mxu0 %v597
  %634 = vmatmul.bf16.gmra.mxu0 %v555
  %v635 = vpop.f32.mrf.mxu0
  %v636 = vadd.f32 %v622, %v635
  %v637 = vpop.f32.mrf.mxu0
  %v638 = vadd.f32 %v624, %v637
  %639 = vdwg.mxu0
  %v640 = vadd.f32 %v562, %v636
  %v641 = vadd.f32 %v563, %v638
  %642 = vst.msk [vmem:[#allocation2] sm:$0xff] %vm26, %v640
  %643 = vst.msk [vmem:[#allocation2 + $0x8] sm:$0xff] %vm26, %v641
  // Predicated region
  $region30: #{jarvis_forward.13} parent=0 // pred_check
    %p644 = pneg %p556
  $region31: #{jarvis_forward.13} parent=0 // pred_check_branch
    %646 = sbr.rel (%p644) target = $region33
  $region32: #{jarvis_forward.13} parent=0 // pred_region
    %v647 = vld [vmem:[#allocation2] sm:$0xff]
    %v648 = vld [vmem:[#allocation2 + $0x8] sm:$0xff]
    %649 = vst.msk [vmem:[%s6] sm:$0xff] %vm26, %v647
    %650 = vst.msk [vmem:[%s6 + $0x8] sm:$0xff] %vm26, %v648
  $region33: #{jarvis_forward.13} parent=0 // pred_fallthru
    _
  // Predicated region
  $region34: #{jarvis_forward.13} parent=0 // pred_check
    _
  $region35: #{jarvis_forward.13} parent=0 // pred_check_branch
    %652 = sbr.rel (0) target = $region37
  $region36: #{jarvis_forward.13} parent=0 // pred_region
    _
  $region37: #{jarvis_forward.13} parent=0 // pred_fallthru
    _
  // Predicated region
  $region38: #{jarvis_forward.13} parent=0 // pred_check
    _
  $region39: #{jarvis_forward.13} parent=0 // pred_check_branch
    %654 = sbr.rel (0) target = $region41
  $region40: #{jarvis_forward.13} parent=0 // pred_region
    _
  $region41: #{jarvis_forward.13} parent=0 // pred_fallthru
    _

// kernel: jarvis_forward.19
$region0: #{jarvis_forward.19}
  #allocation0 [shape = 'u32[]', space=smem, size = 0x4, offset = 0x4, fixed_abs, tag = 'smem constant byte address 0x4 - core index']
  #allocation1 [shape = 'u32[72,128]{1,0:T(1,128)}', space=vmem, size = 0x9000, scoped, tag = 'internal scratch']
  #allocation2 [shape = 'f32[16,256]{1,0:T(8,128)}', space=vmem, size = 0x4000, scoped, tag = 'scratch operand']
  %s0 = inlined_call_operand.vmem [shape: bf16[16,64], index: 0, kind: input, shape index: {}]
  %s1 = inlined_call_operand.vmem [shape: bf16[256,64], index: 1, kind: input, shape index: {}]
  %s2 = inlined_call_operand.hbm [shape: f32[16,256], index: 2, kind: output, shape index: {}]
  %s3 = sld [smem:[#allocation0]]
  $region26: #{jarvis_forward.19} parent=0
    _
  %s5 = ssub.s32 1, %s3
  %s6 = scalar_select 0, %s5, %s3
  $region1: #{jarvis_forward.19} parent=0
    #allocation3 [shape = 'u8[16384]{0}', space=vmem, size = 0x4000, scoped, tag = 'output window, operand 0, single buffered']
    #allocation4 [shape = 's32[1]{0}', space=sflag, size = 0x4, scoped, tag = 'scoped memory for jarvis_forward.19']
    %7 = vsyncpa [#allocation4], 0
    // Predicated region
    $region2: #{jarvis_forward.19} parent=1 // pred_check
      _
    $region3: #{jarvis_forward.19} parent=1 // pred_check_branch
      %9 = sbr.rel (0) target = $region5
    $region4: #{jarvis_forward.19} parent=1 // pred_region
      _
    $region5: #{jarvis_forward.19} parent=1 // pred_fallthru
      _
    // Predicated region
    $region6: #{jarvis_forward.19} parent=1 // pred_check
      _
    $region7: #{jarvis_forward.19} parent=1 // pred_check_branch
      %11 = sbr.rel (0) target = $region9
    $region8: #{jarvis_forward.19} parent=1 // pred_region
      _
    $region9: #{jarvis_forward.19} parent=1 // pred_fallthru
      _
    %p12 = scmp.eq.s32.totalorder 0, 0
    // Predicated region
    $region10: #{jarvis_forward.19} parent=1 // pred_check
      %p13 = pneg %p12
    $region11: #{jarvis_forward.19} parent=1 // pred_check_branch
      %15 = sbr.rel (%p13) target = $region13
    $region12: #{jarvis_forward.19} parent=1 // pred_region
      %16 = vst [vmem:[#allocation2] sm:$0xff] 0.0
      %17 = vst [vmem:[#allocation2 + $0x8] sm:$0xff] 0.0
      %18 = vst [vmem:[#allocation2 + $0x10] sm:$0xff] 0.0
      %19 = vst [vmem:[#allocation2 + $0x18] sm:$0xff] 0.0
    $region13: #{jarvis_forward.19} parent=1 // pred_fallthru
      _
    %v20 = vld [vmem:[#allocation2] sm:$0xff]
    %v21 = vld [vmem:[#allocation2 + $0x8] sm:$0xff]
    %v22 = vld [vmem:[#allocation2 + $0x10] sm:$0xff]
    %v23 = vld [vmem:[#allocation2 + $0x18] sm:$0xff]
    %v24 = vld [vmem:[%s0] sm:$0xf]
    %v25 = vld [vmem:[%s0 + $0x4] sm:$0xf]
    %v26 = vld [vmem:[%s1] sm:$0xf]
    %v27 = vld [vmem:[%s1 + $0x4] sm:$0xf]
    %v28 = vld [vmem:[%s1 + $0x8] sm:$0xf]
    %v29 = vld [vmem:[%s1 + $0xc] sm:$0xf]
    %v30 = vld [vmem:[%s1 + $0x10] sm:$0xf]
    %v31 = vld [vmem:[%s1 + $0x14] sm:$0xf]
    %v32 = vld [vmem:[%s1 + $0x18] sm:$0xf]
    %v33 = vld [vmem:[%s1 + $0x1c] sm:$0xf]
    %v34 = vld [vmem:[%s1 + $0x20] sm:$0xf]
    %v35 = vld [vmem:[%s1 + $0x24] sm:$0xf]
    %v36 = vld [vmem:[%s1 + $0x28] sm:$0xf]
    %v37 = vld [vmem:[%s1 + $0x2c] sm:$0xf]
    %v38 = vld [vmem:[%s1 + $0x30] sm:$0xf]
    %v39 = vld [vmem:[%s1 + $0x34] sm:$0xf]
    %v40 = vld [vmem:[%s1 + $0x38] sm:$0xf]
    %v41 = vld [vmem:[%s1 + $0x3c] sm:$0xf]
    %v42 = vld [vmem:[%s1 + $0x40] sm:$0xf]
    %v43 = vld [vmem:[%s1 + $0x44] sm:$0xf]
    %v44 = vld [vmem:[%s1 + $0x48] sm:$0xf]
    %v45 = vld [vmem:[%s1 + $0x4c] sm:$0xf]
    %v46 = vld [vmem:[%s1 + $0x50] sm:$0xf]
    %v47 = vld [vmem:[%s1 + $0x54] sm:$0xf]
    %v48 = vld [vmem:[%s1 + $0x58] sm:$0xf]
    %v49 = vld [vmem:[%s1 + $0x5c] sm:$0xf]
    %v50 = vld [vmem:[%s1 + $0x60] sm:$0xf]
    %v51 = vld [vmem:[%s1 + $0x64] sm:$0xf]
    %v52 = vld [vmem:[%s1 + $0x68] sm:$0xf]
    %v53 = vld [vmem:[%s1 + $0x6c] sm:$0xf]
    %v54 = vld [vmem:[%s1 + $0x70] sm:$0xf]
    %v55 = vld [vmem:[%s1 + $0x74] sm:$0xf]
    %v56 = vld [vmem:[%s1 + $0x78] sm:$0xf]
    %v57 = vld [vmem:[%s1 + $0x7c] sm:$0xf]
    %v60 = vunpack.c.l.b16 %v24
    %v61 = vunpack.c.l.b16 %v25
    %v62 = vpack.c.b16 %v61, %v60
    %v95 = vunpack.c.l.b16 %v26
    %v96 = vunpack.c.l.b16 %v27
    %v97 = vunpack.c.l.b16 %v28
    %v98 = vunpack.c.l.b16 %v29
    %v99 = vunpack.c.l.b16 %v30
    %v100 = vunpack.c.l.b16 %v31
    %v101 = vunpack.c.l.b16 %v32
    %v102 = vunpack.c.l.b16 %v33
    %v103 = vunpack.c.l.b16 %v34
    %v104 = vunpack.c.l.b16 %v35
    %v105 = vunpack.c.l.b16 %v36
    %v106 = vunpack.c.l.b16 %v37
    %v107 = vunpack.c.l.b16 %v38
    %v108 = vunpack.c.l.b16 %v39
    %v109 = vunpack.c.l.b16 %v40
    %v110 = vunpack.c.l.b16 %v41
    %v111 = vunpack.c.l.b16 %v42
    %v112 = vunpack.c.l.b16 %v43
    %v113 = vunpack.c.l.b16 %v44
    %v114 = vunpack.c.l.b16 %v45
    %v115 = vunpack.c.l.b16 %v46
    %v116 = vunpack.c.l.b16 %v47
    %v117 = vunpack.c.l.b16 %v48
    %v118 = vunpack.c.l.b16 %v49
    %v119 = vunpack.c.l.b16 %v50
    %v120 = vunpack.c.l.b16 %v51
    %v121 = vunpack.c.l.b16 %v52
    %v122 = vunpack.c.l.b16 %v53
    %v123 = vunpack.c.l.b16 %v54
    %v124 = vunpack.c.l.b16 %v55
    %v125 = vunpack.c.l.b16 %v56
    %v126 = vunpack.c.l.b16 %v57
    %v127 = vpack.c.b16 %v96, %v95
    %v128 = vpack.c.b16 %v98, %v97
    %v129 = vpack.c.b16 %v100, %v99
    %v130 = vpack.c.b16 %v102, %v101
    %v131 = vpack.c.b16 %v104, %v103
    %v132 = vpack.c.b16 %v106, %v105
    %v133 = vpack.c.b16 %v108, %v107
    %v134 = vpack.c.b16 %v110, %v109
    %v135 = vpack.c.b16 %v112, %v111
    %v136 = vpack.c.b16 %v114, %v113
    %v137 = vpack.c.b16 %v116, %v115
    %v138 = vpack.c.b16 %v118, %v117
    %v139 = vpack.c.b16 %v120, %v119
    %v140 = vpack.c.b16 %v122, %v121
    %v141 = vpack.c.b16 %v124, %v123
    %v142 = vpack.c.b16 %v126, %v125
    %vm143 = vcmask 523264
    %v145 = vsel %vm143, %v62, 0
    %v148 = vsel %vm143, %v127, 0
    %v151 = vsel %vm143, %v128, 0
    %v154 = vsel %vm143, %v129, 0
    %v157 = vsel %vm143, %v130, 0
    %v160 = vsel %vm143, %v131, 0
    %v163 = vsel %vm143, %v132, 0
    %v166 = vsel %vm143, %v133, 0
    %v169 = vsel %vm143, %v134, 0
    %v172 = vsel %vm143, %v135, 0
    %v175 = vsel %vm143, %v136, 0
    %v178 = vsel %vm143, %v137, 0
    %v181 = vsel %vm143, %v138, 0
    %v184 = vsel %vm143, %v139, 0
    %v187 = vsel %vm143, %v140, 0
    %v190 = vsel %vm143, %v141, 0
    %v193 = vsel %vm143, %v142, 0
    %195 = vmatpush.bf16.xpose.msra.mxu0 %v169
    %196 = vmatpush.bf16.xpose.msra.mxu0 %v166
    %197 = vmatpush.bf16.xpose.msra.mxu0 %v163
    %198 = vmatpush.bf16.xpose.msra.mxu0 %v160
    %199 = vmatpush.bf16.xpose.msra.mxu0 %v157
    %200 = vmatpush.bf16.xpose.msra.mxu0 %v154
    %201 = vmatpush.bf16.xpose.msra.mxu0 %v151
    %202 = vmatpush.bf16.xpose.msra.mxu0 %v148
    %203 = vmatmul.bf16.gmra.mxu0 %v145
    %v204 = vpop.f32.mrf.mxu0
    %v205 = vadd.f32 0.0, %v204
    %v206 = vpop.f32.mrf.mxu0
    %v207 = vadd.f32 0.0, %v206
    %208 = vdwg.mxu0
    %209 = vmatpush.bf16.xpose.msra.mxu0 %v193
    %210 = vmatpush.bf16.xpose.msra.mxu0 %v190
    %211 = vmatpush.bf16.xpose.msra.mxu0 %v187
    %212 = vmatpush.bf16.xpose.msra.mxu0 %v184
    %213 = vmatpush.bf16.xpose.msra.mxu0 %v181
    %214 = vmatpush.bf16.xpose.msra.mxu0 %v178
    %215 = vmatpush.bf16.xpose.msra.mxu0 %v175
    %216 = vmatpush.bf16.xpose.msra.mxu0 %v172
    %217 = vmatmul.bf16.gmra.mxu0 %v145
    %v218 = vpop.f32.mrf.mxu0
    %v219 = vadd.f32 0.0, %v218
    %v220 = vpop.f32.mrf.mxu0
    %v221 = vadd.f32 0.0, %v220
    %222 = vdwg.mxu0
    %v223 = vadd.f32 %v20, %v205
    %v224 = vadd.f32 %v21, %v219
    %v225 = vadd.f32 %v22, %v207
    %v226 = vadd.f32 %v23, %v221
    %227 = vst [vmem:[#allocation2] sm:$0xff] %v223
    %228 = vst [vmem:[#allocation2 + $0x8] sm:$0xff] %v224
    %229 = vst [vmem:[#allocation2 + $0x10] sm:$0xff] %v225
    %230 = vst [vmem:[#allocation2 + $0x18] sm:$0xff] %v226
    // Predicated region
    $region14: #{jarvis_forward.19} parent=1 // pred_check
      %p231 = pneg %p12
    $region15: #{jarvis_forward.19} parent=1 // pred_check_branch
      %233 = sbr.rel (%p231) target = $region17
    $region16: #{jarvis_forward.19} parent=1 // pred_region
      %v234 = vld [vmem:[#allocation2] sm:$0xff]
      %v235 = vld [vmem:[#allocation2 + $0x8] sm:$0xff]
      %v236 = vld [vmem:[#allocation2 + $0x10] sm:$0xff]
      %v237 = vld [vmem:[#allocation2 + $0x18] sm:$0xff]
      %238 = vst [vmem:[#allocation3] sm:$0xff] %v234
      %239 = vst [vmem:[#allocation3 + $0x8] sm:$0xff] %v235
      %240 = vst [vmem:[#allocation3 + $0x10] sm:$0xff] %v236
      %241 = vst [vmem:[#allocation3 + $0x18] sm:$0xff] %v237
    $region17: #{jarvis_forward.19} parent=1 // pred_fallthru
      _
    // Predicated region
    $region18: #{jarvis_forward.19} parent=1 // pred_check
      _
    $region19: #{jarvis_forward.19} parent=1 // pred_check_branch
      %243 = sbr.rel (0) target = $region21
    $region20: #{jarvis_forward.19} parent=1 // pred_region
      %245 = vsyncadd [#allocation4], 0
      %s246 = sshll.u32 [#allocation3], 4
      %s247 = int_to_ptr.vmem [resolvable:$true] %s246
      %s248 = sshll.u32 %s2, 4
      %s249 = int_to_ptr.hbm [resolvable:$true] %s248
      %254 = dma.vmem_to_hbm [thread:$0]  %s247, 512, %s249, [#allocation4], 256, 256, 16
    $region21: #{jarvis_forward.19} parent=1 // pred_fallthru
      _
    // Predicated region
    $region22: #{jarvis_forward.19} parent=1 // pred_check
      _
    $region23: #{jarvis_forward.19} parent=1 // pred_check_branch
      %256 = sbr.rel (0) target = $region25
    $region24: #{jarvis_forward.19} parent=1 // pred_region
      %258 = dma.done [#allocation4], 512
    $region25: #{jarvis_forward.19} parent=1 // pred_fallthru
      _
    %259 = vsyncpa [#allocation4], 1

</llo_original>
